<compile_context>
chip_gen: v5e
topology: v5e:2x2
jax: 0.10.0
libtpu: 0.0.40
codegen_flags: <defaults>
</compile_context>

<pallas_src>
import functools
import math

import jax
import jax.numpy as jnp
from jax import lax
from jax.experimental import pallas as pl
from jax.experimental.pallas import tpu as pltpu


# ---------------------------------------------------------------------------
# Fused kernel
# ---------------------------------------------------------------------------

def _linear_attention_kernel(x_ref, wq_hm_ref, bq_hm_ref, wkT_ref, bk_ref,
                             wvT_ref, bv_ref, wproj_hm_ref, bproj_ref,
                             o_ref, kT_scr, vT_scr,
                             *, num_heads, head_dim, chunk_size, q_tile):
    S, H = x_ref.shape                      # batch dim squeezed by BlockSpec
    NH, D, TQ = num_heads, head_dim, q_tile
    qi = pl.program_id(1)
    scale = float(D) ** -0.5
    AB_T = (((1,), (1,)), ((), ()))         # contract last dims: A @ B^T

    # ---- K^T / V^T projection for the whole sequence, once per batch ------
    # (scratch persists across the q-tile grid axis; the x slab's block index
    #  is constant over that axis, so it is DMA'd only once per batch.)
    @pl.when(qi == 0)
    def _():
        x_bf = x_ref[...].astype(jnp.bfloat16)                       # (S, H)
        kT = lax.dot_general(wkT_ref[...], x_bf, AB_T,
                             preferred_element_type=jnp.float32) + bk_ref[...]
        vT = lax.dot_general(wvT_ref[...], x_bf, AB_T,
                             preferred_element_type=jnp.float32) + bv_ref[...]
        kT_scr[...] = kT.astype(jnp.bfloat16)                        # (H, S)
        vT_scr[...] = vT.astype(jnp.bfloat16)

    # ---- q tile for this grid step (cast to bf16 in-kernel) ----------------
    row0 = pl.multiple_of(qi * TQ, TQ)
    xq_bf = x_ref[pl.ds(row0, TQ), :].astype(jnp.bfloat16)           # (TQ, H)

    # Static kv-chunk boundaries.  With a single chunk (S <= chunk_size) this
    # is exactly the module's plain softmax-attention branch; otherwise each
    # kv chunk is softmax-normalized independently and the results averaged,
    # matching chunk_compute_attention.
    bounds = [(s0, min(s0 + chunk_size, S)) for s0 in range(0, S, chunk_size)]
    inv_n = 1.0 / float(len(bounds))

    out_acc = jnp.zeros((TQ, H), jnp.float32)
    for h in range(NH):
        # Per-head q projection from per-head weight slices (no lane-narrow
        # activation slicing).
        q_h = (jnp.dot(xq_bf, wq_hm_ref[h],
                       preferred_element_type=jnp.float32)
               + bq_hm_ref[h]).astype(jnp.bfloat16)                   # (TQ, D)

        acc_h = jnp.zeros((TQ, D), jnp.float32)
        for ks, ke in bounds:
            # 8-sublane-aligned head slices of the resident K^T / V^T.
            kT_h = kT_scr[h * D:(h + 1) * D, ks:ke]                   # (D, ck)
            vT_h = vT_scr[h * D:(h + 1) * D, ks:ke]                   # (D, ck)

            s = jnp.dot(q_h, kT_h,
                        preferred_element_type=jnp.float32) * scale   # (TQ, ck)
            s = s - jnp.max(s, axis=-1, keepdims=True)
            p = jnp.exp(s)
            p = p / jnp.sum(p, axis=-1, keepdims=True)                # exact
            acc_h = acc_h + lax.dot_general(
                p.astype(jnp.bfloat16), vT_h, AB_T,
                preferred_element_type=jnp.float32)                   # (TQ, D)

        if inv_n != 1.0:
            acc_h = acc_h * inv_n
        # Fold this head straight into the output projection (no concat of
        # head pieces, no full (S, H) attn slab).
        out_acc = out_acc + jnp.dot(acc_h.astype(jnp.bfloat16),
                                    wproj_hm_ref[h],
                                    preferred_element_type=jnp.float32)

    o_ref[...] = out_acc + bproj_ref[...]


# ---------------------------------------------------------------------------
# Wrapper
# ---------------------------------------------------------------------------

def _pick_q_tile(seq_len, target=512):
    """Largest q-tile <= target that is a multiple of 8 and divides seq_len."""
    if seq_len <= target:
        return seq_len
    start = (min(target, seq_len) // 8) * 8
    for t in range(start, 7, -8):
        if seq_len % t == 0:
            return t
    return seq_len


@functools.partial(jax.jit, static_argnames=("num_heads", "chunk_size"))
def linear_attention_forward(params, x, num_heads=8, chunk_size=512):
    """x: (B, S, H) float32  ->  (B, S, H) float32."""
    B, S, H = x.shape
    assert H % num_heads == 0
    NH = num_heads
    D = H // NH

    wqkv, bqkv = params["qkv"]     # (H, 3H), (3H,)
    wproj, bproj = params["proj"]  # (H, H),  (H,)

    # One-time weight reshapes / bf16 casts (weights only; x stays f32).
    wq, wk, wv = wqkv[:, :H], wqkv[:, H:2 * H], wqkv[:, 2 * H:]
    bq, bk, bv = bqkv[:H], bqkv[H:2 * H], bqkv[2 * H:]

    wq_hm = wq.reshape(H, NH, D).transpose(1, 0, 2).astype(jnp.bfloat16)  # (NH,H,D)
    bq_hm = bq.reshape(NH, 1, D)                                          # f32
    wk_t = wk.T.astype(jnp.bfloat16)                                      # (H,H)
    bk_col = bk.reshape(H, 1)
    wv_t = wv.T.astype(jnp.bfloat16)                                      # (H,H)
    bv_col = bv.reshape(H, 1)
    wproj_hm = wproj.reshape(NH, D, H).astype(jnp.bfloat16)               # (NH,D,H)
    bproj_row = bproj.reshape(1, H)

    TQ = _pick_q_tile(S)
    n_q = S // TQ

    kernel = functools.partial(_linear_attention_kernel, num_heads=NH,
                               head_dim=D, chunk_size=chunk_size, q_tile=TQ)

    grid_spec = pltpu.PrefetchScalarGridSpec(
        num_scalar_prefetch=0,
        grid=(B, n_q),
        in_specs=[
            # full per-batch x slab (constant over the q axis -> one DMA/batch)
            pl.BlockSpec((pl.Squeezed(), S, H), lambda b, q: (b, 0, 0)),
            pl.BlockSpec((NH, H, D), lambda b, q: (0, 0, 0)),   # wq per head
            pl.BlockSpec((NH, 1, D), lambda b, q: (0, 0, 0)),   # bq per head
            pl.BlockSpec((H, H), lambda b, q: (0, 0)),          # Wk^T
            pl.BlockSpec((H, 1), lambda b, q: (0, 0)),          # bk
            pl.BlockSpec((H, H), lambda b, q: (0, 0)),          # Wv^T
            pl.BlockSpec((H, 1), lambda b, q: (0, 0)),          # bv
            pl.BlockSpec((NH, D, H), lambda b, q: (0, 0, 0)),   # Wproj per head
            pl.BlockSpec((1, H), lambda b, q: (0, 0)),          # bproj
        ],
        out_specs=pl.BlockSpec((pl.Squeezed(), TQ, H), lambda b, q: (b, q, 0)),
        scratch_shapes=[
            pltpu.VMEM((H, S), jnp.bfloat16),   # K^T, resident per batch
            pltpu.VMEM((H, S), jnp.bfloat16),   # V^T, resident per batch
        ],
    )

    return pl.pallas_call(
        kernel,
        out_shape=jax.ShapeDtypeStruct((B, S, H), jnp.float32),
        grid_spec=grid_spec,
        compiler_params=pltpu.CompilerParams(
            dimension_semantics=("parallel", "arbitrary"),
            vmem_limit_bytes=48 * 1024 * 1024),
    )(x, wq_hm, bq_hm, wk_t, bk_col, wv_t, bv_col, wproj_hm, bproj_row)


# ---------------------------------------------------------------------------
# Deterministic parameter init (PyTorch nn.Linear-style uniform)
# ---------------------------------------------------------------------------

def init_params(key, hidden_size=64):
    def lin_init(k, fan_in, fan_out):
        kw, kb = jax.random.split(k)
        bound = 1.0 / math.sqrt(fan_in)
        w = jax.random.uniform(kw, (fan_in, fan_out), jnp.float32, -bound, bound)
        b = jax.random.uniform(kb, (fan_out,), jnp.float32, -bound, bound)
        return w, b

    k_qkv, k_proj = jax.random.split(key)
    return {
        "qkv": lin_init(k_qkv, hidden_size, 3 * hidden_size),
        "proj": lin_init(k_proj, hidden_size, hidden_size),
    }


# ---------------------------------------------------------------------------
# Driver
# ---------------------------------------------------------------------------

if __name__ == "__main__":
    key = jax.random.PRNGKey(0)
    kx, kp, kx2 = jax.random.split(key, 3)

    # Main config (single chunk -> the module's plain softmax-attention branch).
    B, S, HIDDEN, HEADS, CHUNK = 2, 8, 64, 8, 512
    x = jax.random.normal(kx, (B, S, HIDDEN), dtype=jnp.float32)
    params = init_params(kp, hidden_size=HIDDEN)

    out = linear_attention_forward(params, x, num_heads=HEADS, chunk_size=CHUNK)
    out = jax.block_until_ready(out)
    assert out.shape == (B, S, HIDDEN), out.shape
    assert bool(jnp.all(jnp.isfinite(out))), "non-finite output"

    # Longer sequence: exercises the multi-q-tile grid, persistent K/V scratch
    # reuse across grid steps, and the chunked (averaged) branch (S > chunk).
    S2 = 1024
    x2 = jax.random.normal(kx2, (1, S2, HIDDEN), dtype=jnp.float32)
    out2 = linear_attention_forward(params, x2, num_heads=HEADS, chunk_size=CHUNK)
    out2 = jax.block_until_ready(out2)
    assert out2.shape == (1, S2, HIDDEN), out2.shape
    assert bool(jnp.all(jnp.isfinite(out2))), "non-finite output (long seq)"

    print("KERNEL_OK")
</pallas_src>

<mosaic_0001>
module attributes {stable_mosaic.version = 11 : i64} {
  func.func @_linear_attention_kernel(%arg0: i32, %arg1: i32, %arg2: memref<1x8x64xf32, #tpu.memory_space<vmem>>, %arg3: memref<8x64x8xbf16, #tpu.memory_space<vmem>>, %arg4: memref<8x1x8xf32, #tpu.memory_space<vmem>>, %arg5: memref<64x64xbf16, #tpu.memory_space<vmem>>, %arg6: memref<64x1xf32, #tpu.memory_space<vmem>>, %arg7: memref<64x64xbf16, #tpu.memory_space<vmem>>, %arg8: memref<64x1xf32, #tpu.memory_space<vmem>>, %arg9: memref<8x8x64xbf16, #tpu.memory_space<vmem>>, %arg10: memref<1x64xf32, #tpu.memory_space<vmem>>, %arg11: memref<1x8x64xf32, #tpu.memory_space<vmem>>, %arg12: memref<64x8xbf16, #tpu.memory_space<vmem>>, %arg13: memref<64x8xbf16, #tpu.memory_space<vmem>>) attributes {dimension_semantics = [#tpu.dimension_semantics<parallel>, #tpu.dimension_semantics<arbitrary>], iteration_bounds = array<i64: 2, 1>, scalar_prefetch = 0 : i64, scratch_operands = 2 : i64, tpu.core_type = #tpu.core_type<tc>, window_params = [{transform_indices = @transform_0, window_bounds = array<i64: 1, 8, 64>}, {pipeline_mode = #tpu.pipeline_mode<synchronous>, transform_indices = @transform_1, window_bounds = array<i64: 8, 64, 8>}, {pipeline_mode = #tpu.pipeline_mode<synchronous>, transform_indices = @transform_2, window_bounds = array<i64: 8, 1, 8>}, {pipeline_mode = #tpu.pipeline_mode<synchronous>, transform_indices = @transform_3, window_bounds = array<i64: 64, 64>}, {pipeline_mode = #tpu.pipeline_mode<synchronous>, transform_indices = @transform_4, window_bounds = array<i64: 64, 1>}, {pipeline_mode = #tpu.pipeline_mode<synchronous>, transform_indices = @transform_5, window_bounds = array<i64: 64, 64>}, {pipeline_mode = #tpu.pipeline_mode<synchronous>, transform_indices = @transform_6, window_bounds = array<i64: 64, 1>}, {pipeline_mode = #tpu.pipeline_mode<synchronous>, transform_indices = @transform_7, window_bounds = array<i64: 8, 8, 64>}, {pipeline_mode = #tpu.pipeline_mode<synchronous>, transform_indices = @transform_8, window_bounds = array<i64: 1, 64>}, {transform_indices = @transform_9, window_bounds = array<i64: 1, 8, 64>}]} {
    %c0_i32 = arith.constant 0 : i32
    %0 = arith.cmpi eq, %arg1, %c0_i32 : i32
    %1 = arith.extui %0 : i1 to i32
    %c0_i32_0 = arith.constant 0 : i32
    %2 = arith.cmpi ne, %1, %c0_i32_0 : i32
    scf.if %2 {
      %c0_161 = arith.constant 0 : index
      %c0_162 = arith.constant 0 : index
      %c0_163 = arith.constant 0 : index
      %264 = vector.load %arg2[%c0_161, %c0_162, %c0_163] : memref<1x8x64xf32, #tpu.memory_space<vmem>>, vector<1x8x64xf32>
      %265 = vector.shape_cast %264 : vector<1x8x64xf32> to vector<8x64xf32>
      %266 = arith.truncf %265 : vector<8x64xf32> to vector<8x64xbf16>
      %c0_164 = arith.constant 0 : index
      %c0_165 = arith.constant 0 : index
      %267 = vector.load %arg5[%c0_164, %c0_165] : memref<64x64xbf16, #tpu.memory_space<vmem>>, vector<64x64xbf16>
      %cst_166 = arith.constant dense<0.000000e+00> : vector<64x8xf32>
      %268 = tpu.matmul %267, %266, %cst_166 {dimension_numbers = #tpu.dot_dimension_numbers<[1], [1], [0], [0], [0, 0, 1, 0], [], []>} : vector<64x64xbf16>, vector<8x64xbf16>, vector<64x8xf32> -> vector<64x8xf32>
      %c0_167 = arith.constant 0 : index
      %c0_168 = arith.constant 0 : index
      %269 = vector.load %arg6[%c0_167, %c0_168] : memref<64x1xf32, #tpu.memory_space<vmem>>, vector<64x1xf32>
      %270 = vector.broadcast %269 : vector<64x1xf32> to vector<64x8xf32>
      %271 = arith.addf %268, %270 : vector<64x8xf32>
      %c0_169 = arith.constant 0 : index
      %c0_170 = arith.constant 0 : index
      %272 = vector.load %arg7[%c0_169, %c0_170] : memref<64x64xbf16, #tpu.memory_space<vmem>>, vector<64x64xbf16>
      %cst_171 = arith.constant dense<0.000000e+00> : vector<64x8xf32>
      %273 = tpu.matmul %272, %266, %cst_171 {dimension_numbers = #tpu.dot_dimension_numbers<[1], [1], [0], [0], [0, 0, 1, 0], [], []>} : vector<64x64xbf16>, vector<8x64xbf16>, vector<64x8xf32> -> vector<64x8xf32>
      %c0_172 = arith.constant 0 : index
      %c0_173 = arith.constant 0 : index
      %274 = vector.load %arg8[%c0_172, %c0_173] : memref<64x1xf32, #tpu.memory_space<vmem>>, vector<64x1xf32>
      %275 = vector.broadcast %274 : vector<64x1xf32> to vector<64x8xf32>
      %276 = arith.addf %273, %275 : vector<64x8xf32>
      %277 = arith.truncf %271 : vector<64x8xf32> to vector<64x8xbf16>
      %c0_174 = arith.constant 0 : index
      %c0_175 = arith.constant 0 : index
      %278 = vector.load %arg12[%c0_174, %c0_175] : memref<64x8xbf16, #tpu.memory_space<vmem>>, vector<64x8xbf16>
      tpu.vector_store %arg12[%c0_174, %c0_175], %277 {strides = array<i32>} : memref<64x8xbf16, #tpu.memory_space<vmem>>, vector<64x8xbf16>,
      %279 = arith.truncf %276 : vector<64x8xf32> to vector<64x8xbf16>
      %c0_176 = arith.constant 0 : index
      %c0_177 = arith.constant 0 : index
      %280 = vector.load %arg13[%c0_176, %c0_177] : memref<64x8xbf16, #tpu.memory_space<vmem>>, vector<64x8xbf16>
      tpu.vector_store %arg13[%c0_176, %c0_177], %279 {strides = array<i32>} : memref<64x8xbf16, #tpu.memory_space<vmem>>, vector<64x8xbf16>,
    } else {
    }
    %c8_i32 = arith.constant 8 : i32
    %3 = arith.muli %arg1, %c8_i32 : i32
    %4 = tpu.assume_multiple %3, 8 : i32
    %c0 = arith.constant 0 : index
    %5 = arith.index_cast %4 : i32 to index
    %c0_1 = arith.constant 0 : index
    %6 = vector.load %arg2[%c0, %5, %c0_1] : memref<1x8x64xf32, #tpu.memory_space<vmem>>, vector<1x8x64xf32>
    %7 = vector.shape_cast %6 : vector<1x8x64xf32> to vector<8x64xf32>
    %8 = arith.truncf %7 : vector<8x64xf32> to vector<8x64xbf16>
    %cst = arith.constant 0.000000e+00 : f32
    %9 = vector.broadcast %cst : f32 to vector<8x64xf32>
    %c0_2 = arith.constant 0 : index
    %c0_3 = arith.constant 0 : index
    %c0_4 = arith.constant 0 : index
    %10 = vector.load %arg3[%c0_2, %c0_3, %c0_4] : memref<8x64x8xbf16, #tpu.memory_space<vmem>>, vector<1x64x8xbf16>
    %11 = vector.shape_cast %10 : vector<1x64x8xbf16> to vector<64x8xbf16>
    %cst_5 = arith.constant dense<0.000000e+00> : vector<8x8xf32>
    %12 = tpu.matmul %8, %11, %cst_5 {dimension_numbers = #tpu.dot_dimension_numbers<[1], [0], [0], [1], [0, 0, 1, 1], [], []>} : vector<8x64xbf16>, vector<64x8xbf16>, vector<8x8xf32> -> vector<8x8xf32>
    %c0_6 = arith.constant 0 : index
    %c0_7 = arith.constant 0 : index
    %c0_8 = arith.constant 0 : index
    %13 = vector.load %arg4[%c0_6, %c0_7, %c0_8] : memref<8x1x8xf32, #tpu.memory_space<vmem>>, vector<1x1x8xf32>
    %14 = vector.shape_cast %13 : vector<1x1x8xf32> to vector<1x8xf32>
    %15 = vector.broadcast %14 : vector<1x8xf32> to vector<8x8xf32>
    %16 = arith.addf %12, %15 : vector<8x8xf32>
    %17 = arith.truncf %16 : vector<8x8xf32> to vector<8x8xbf16>
    %cst_9 = arith.constant 0.000000e+00 : f32
    %18 = vector.broadcast %cst_9 : f32 to vector<8x8xf32>
    %c0_10 = arith.constant 0 : index
    %c0_11 = arith.constant 0 : index
    %19 = vector.load %arg12[%c0_10, %c0_11] : memref<64x8xbf16, #tpu.memory_space<vmem>>, vector<8x8xbf16>
    %c0_12 = arith.constant 0 : index
    %c0_13 = arith.constant 0 : index
    %20 = vector.load %arg13[%c0_12, %c0_13] : memref<64x8xbf16, #tpu.memory_space<vmem>>, vector<8x8xbf16>
    %cst_14 = arith.constant dense<0.000000e+00> : vector<8x8xf32>
    %21 = tpu.matmul %17, %19, %cst_14 {dimension_numbers = #tpu.dot_dimension_numbers<[1], [0], [0], [1], [0, 0, 1, 1], [], []>} : vector<8x8xbf16>, vector<8x8xbf16>, vector<8x8xf32> -> vector<8x8xf32>
    %cst_15 = arith.constant 0.353553385 : f32
    %22 = vector.broadcast %cst_15 : f32 to vector<8x8xf32>
    %23 = arith.mulf %21, %22 : vector<8x8xf32>
    %cst_16 = arith.constant dense<0xFF800000> : vector<8xf32>
    %24 = vector.multi_reduction <maximumf>, %23, %cst_16 [1] : vector<8x8xf32> to vector<8xf32>
    %25 = vector.shape_cast %24 : vector<8xf32> to vector<8x1xf32>
    %26 = vector.broadcast %25 : vector<8x1xf32> to vector<8x8xf32>
    %27 = arith.subf %23, %26 : vector<8x8xf32>
    %28 = math.exp %27 : vector<8x8xf32>
    %cst_17 = arith.constant dense<0.000000e+00> : vector<8xf32>
    %29 = vector.multi_reduction <add>, %28, %cst_17 [1] : vector<8x8xf32> to vector<8xf32>
    %30 = vector.shape_cast %29 : vector<8xf32> to vector<8x1xf32>
    %31 = vector.broadcast %30 : vector<8x1xf32> to vector<8x8xf32>
    %32 = arith.divf %28, %31 : vector<8x8xf32>
    %33 = arith.truncf %32 : vector<8x8xf32> to vector<8x8xbf16>
    %cst_18 = arith.constant dense<0.000000e+00> : vector<8x8xf32>
    %34 = tpu.matmul %33, %20, %cst_18 {dimension_numbers = #tpu.dot_dimension_numbers<[1], [1], [0], [0], [0, 0, 1, 0], [], []>} : vector<8x8xbf16>, vector<8x8xbf16>, vector<8x8xf32> -> vector<8x8xf32>
    %35 = arith.addf %18, %34 : vector<8x8xf32>
    %36 = arith.truncf %35 : vector<8x8xf32> to vector<8x8xbf16>
    %c0_19 = arith.constant 0 : index
    %c0_20 = arith.constant 0 : index
    %c0_21 = arith.constant 0 : index
    %37 = vector.load %arg9[%c0_19, %c0_20, %c0_21] : memref<8x8x64xbf16, #tpu.memory_space<vmem>>, vector<1x8x64xbf16>
    %38 = vector.shape_cast %37 : vector<1x8x64xbf16> to vector<8x64xbf16>
    %cst_22 = arith.constant dense<0.000000e+00> : vector<8x64xf32>
    %39 = tpu.matmul %36, %38, %cst_22 {dimension_numbers = #tpu.dot_dimension_numbers<[1], [0], [0], [1], [0, 0, 1, 1], [], []>} : vector<8x8xbf16>, vector<8x64xbf16>, vector<8x64xf32> -> vector<8x64xf32>
    %40 = arith.addf %9, %39 : vector<8x64xf32>
    %c1 = arith.constant 1 : index
    %c0_23 = arith.constant 0 : index
    %c0_24 = arith.constant 0 : index
    %41 = vector.load %arg3[%c1, %c0_23, %c0_24] : memref<8x64x8xbf16, #tpu.memory_space<vmem>>, vector<1x64x8xbf16>
    %42 = vector.shape_cast %41 : vector<1x64x8xbf16> to vector<64x8xbf16>
    %cst_25 = arith.constant dense<0.000000e+00> : vector<8x8xf32>
    %43 = tpu.matmul %8, %42, %cst_25 {dimension_numbers = #tpu.dot_dimension_numbers<[1], [0], [0], [1], [0, 0, 1, 1], [], []>} : vector<8x64xbf16>, vector<64x8xbf16>, vector<8x8xf32> -> vector<8x8xf32>
    %c1_26 = arith.constant 1 : index
    %c0_27 = arith.constant 0 : index
    %c0_28 = arith.constant 0 : index
    %44 = vector.load %arg4[%c1_26, %c0_27, %c0_28] : memref<8x1x8xf32, #tpu.memory_space<vmem>>, vector<1x1x8xf32>
    %45 = vector.shape_cast %44 : vector<1x1x8xf32> to vector<1x8xf32>
    %46 = vector.broadcast %45 : vector<1x8xf32> to vector<8x8xf32>
    %47 = arith.addf %43, %46 : vector<8x8xf32>
    %48 = arith.truncf %47 : vector<8x8xf32> to vector<8x8xbf16>
    %cst_29 = arith.constant 0.000000e+00 : f32
    %49 = vector.broadcast %cst_29 : f32 to vector<8x8xf32>
    %c8 = arith.constant 8 : index
    %c0_30 = arith.constant 0 : index
    %50 = vector.load %arg12[%c8, %c0_30] : memref<64x8xbf16, #tpu.memory_space<vmem>>, vector<8x8xbf16>
    %c8_31 = arith.constant 8 : index
    %c0_32 = arith.constant 0 : index
    %51 = vector.load %arg13[%c8_31, %c0_32] : memref<64x8xbf16, #tpu.memory_space<vmem>>, vector<8x8xbf16>
    %cst_33 = arith.constant dense<0.000000e+00> : vector<8x8xf32>
    %52 = tpu.matmul %48, %50, %cst_33 {dimension_numbers = #tpu.dot_dimension_numbers<[1], [0], [0], [1], [0, 0, 1, 1], [], []>} : vector<8x8xbf16>, vector<8x8xbf16>, vector<8x8xf32> -> vector<8x8xf32>
    %cst_34 = arith.constant 0.353553385 : f32
    %53 = vector.broadcast %cst_34 : f32 to vector<8x8xf32>
    %54 = arith.mulf %52, %53 : vector<8x8xf32>
    %cst_35 = arith.constant dense<0xFF800000> : vector<8xf32>
    %55 = vector.multi_reduction <maximumf>, %54, %cst_35 [1] : vector<8x8xf32> to vector<8xf32>
    %56 = vector.shape_cast %55 : vector<8xf32> to vector<8x1xf32>
    %57 = vector.broadcast %56 : vector<8x1xf32> to vector<8x8xf32>
    %58 = arith.subf %54, %57 : vector<8x8xf32>
    %59 = math.exp %58 : vector<8x8xf32>
    %cst_36 = arith.constant dense<0.000000e+00> : vector<8xf32>
    %60 = vector.multi_reduction <add>, %59, %cst_36 [1] : vector<8x8xf32> to vector<8xf32>
    %61 = vector.shape_cast %60 : vector<8xf32> to vector<8x1xf32>
    %62 = vector.broadcast %61 : vector<8x1xf32> to vector<8x8xf32>
    %63 = arith.divf %59, %62 : vector<8x8xf32>
    %64 = arith.truncf %63 : vector<8x8xf32> to vector<8x8xbf16>
    %cst_37 = arith.constant dense<0.000000e+00> : vector<8x8xf32>
    %65 = tpu.matmul %64, %51, %cst_37 {dimension_numbers = #tpu.dot_dimension_numbers<[1], [1], [0], [0], [0, 0, 1, 0], [], []>} : vector<8x8xbf16>, vector<8x8xbf16>, vector<8x8xf32> -> vector<8x8xf32>
    %66 = arith.addf %49, %65 : vector<8x8xf32>
    %67 = arith.truncf %66 : vector<8x8xf32> to vector<8x8xbf16>
    %c1_38 = arith.constant 1 : index
    %c0_39 = arith.constant 0 : index
    %c0_40 = arith.constant 0 : index
    %68 = vector.load %arg9[%c1_38, %c0_39, %c0_40] : memref<8x8x64xbf16, #tpu.memory_space<vmem>>, vector<1x8x64xbf16>
    %69 = vector.shape_cast %68 : vector<1x8x64xbf16> to vector<8x64xbf16>
    %cst_41 = arith.constant dense<0.000000e+00> : vector<8x64xf32>
    %70 = tpu.matmul %67, %69, %cst_41 {dimension_numbers = #tpu.dot_dimension_numbers<[1], [0], [0], [1], [0, 0, 1, 1], [], []>} : vector<8x8xbf16>, vector<8x64xbf16>, vector<8x64xf32> -> vector<8x64xf32>
    %71 = arith.addf %40, %70 : vector<8x64xf32>
    %c2 = arith.constant 2 : index
    %c0_42 = arith.constant 0 : index
    %c0_43 = arith.constant 0 : index
    %72 = vector.load %arg3[%c2, %c0_42, %c0_43] : memref<8x64x8xbf16, #tpu.memory_space<vmem>>, vector<1x64x8xbf16>
    %73 = vector.shape_cast %72 : vector<1x64x8xbf16> to vector<64x8xbf16>
    %cst_44 = arith.constant dense<0.000000e+00> : vector<8x8xf32>
    %74 = tpu.matmul %8, %73, %cst_44 {dimension_numbers = #tpu.dot_dimension_numbers<[1], [0], [0], [1], [0, 0, 1, 1], [], []>} : vector<8x64xbf16>, vector<64x8xbf16>, vector<8x8xf32> -> vector<8x8xf32>
    %c2_45 = arith.constant 2 : index
    %c0_46 = arith.constant 0 : index
    %c0_47 = arith.constant 0 : index
    %75 = vector.load %arg4[%c2_45, %c0_46, %c0_47] : memref<8x1x8xf32, #tpu.memory_space<vmem>>, vector<1x1x8xf32>
    %76 = vector.shape_cast %75 : vector<1x1x8xf32> to vector<1x8xf32>
    %77 = vector.broadcast %76 : vector<1x8xf32> to vector<8x8xf32>
    %78 = arith.addf %74, %77 : vector<8x8xf32>
    %79 = arith.truncf %78 : vector<8x8xf32> to vector<8x8xbf16>
    %cst_48 = arith.constant 0.000000e+00 : f32
    %80 = vector.broadcast %cst_48 : f32 to vector<8x8xf32>
    %c16 = arith.constant 16 : index
    %c0_49 = arith.constant 0 : index
    %81 = vector.load %arg12[%c16, %c0_49] : memref<64x8xbf16, #tpu.memory_space<vmem>>, vector<8x8xbf16>
    %c16_50 = arith.constant 16 : index
    %c0_51 = arith.constant 0 : index
    %82 = vector.load %arg13[%c16_50, %c0_51] : memref<64x8xbf16, #tpu.memory_space<vmem>>, vector<8x8xbf16>
    %cst_52 = arith.constant dense<0.000000e+00> : vector<8x8xf32>
    %83 = tpu.matmul %79, %81, %cst_52 {dimension_numbers = #tpu.dot_dimension_numbers<[1], [0], [0], [1], [0, 0, 1, 1], [], []>} : vector<8x8xbf16>, vector<8x8xbf16>, vector<8x8xf32> -> vector<8x8xf32>
    %cst_53 = arith.constant 0.353553385 : f32
    %84 = vector.broadcast %cst_53 : f32 to vector<8x8xf32>
    %85 = arith.mulf %83, %84 : vector<8x8xf32>
    %cst_54 = arith.constant dense<0xFF800000> : vector<8xf32>
    %86 = vector.multi_reduction <maximumf>, %85, %cst_54 [1] : vector<8x8xf32> to vector<8xf32>
    %87 = vector.shape_cast %86 : vector<8xf32> to vector<8x1xf32>
    %88 = vector.broadcast %87 : vector<8x1xf32> to vector<8x8xf32>
    %89 = arith.subf %85, %88 : vector<8x8xf32>
    %90 = math.exp %89 : vector<8x8xf32>
    %cst_55 = arith.constant dense<0.000000e+00> : vector<8xf32>
    %91 = vector.multi_reduction <add>, %90, %cst_55 [1] : vector<8x8xf32> to vector<8xf32>
    %92 = vector.shape_cast %91 : vector<8xf32> to vector<8x1xf32>
    %93 = vector.broadcast %92 : vector<8x1xf32> to vector<8x8xf32>
    %94 = arith.divf %90, %93 : vector<8x8xf32>
    %95 = arith.truncf %94 : vector<8x8xf32> to vector<8x8xbf16>
    %cst_56 = arith.constant dense<0.000000e+00> : vector<8x8xf32>
    %96 = tpu.matmul %95, %82, %cst_56 {dimension_numbers = #tpu.dot_dimension_numbers<[1], [1], [0], [0], [0, 0, 1, 0], [], []>} : vector<8x8xbf16>, vector<8x8xbf16>, vector<8x8xf32> -> vector<8x8xf32>
    %97 = arith.addf %80, %96 : vector<8x8xf32>
    %98 = arith.truncf %97 : vector<8x8xf32> to vector<8x8xbf16>
    %c2_57 = arith.constant 2 : index
    %c0_58 = arith.constant 0 : index
    %c0_59 = arith.constant 0 : index
    %99 = vector.load %arg9[%c2_57, %c0_58, %c0_59] : memref<8x8x64xbf16, #tpu.memory_space<vmem>>, vector<1x8x64xbf16>
    %100 = vector.shape_cast %99 : vector<1x8x64xbf16> to vector<8x64xbf16>
    %cst_60 = arith.constant dense<0.000000e+00> : vector<8x64xf32>
    %101 = tpu.matmul %98, %100, %cst_60 {dimension_numbers = #tpu.dot_dimension_numbers<[1], [0], [0], [1], [0, 0, 1, 1], [], []>} : vector<8x8xbf16>, vector<8x64xbf16>, vector<8x64xf32> -> vector<8x64xf32>
    %102 = arith.addf %71, %101 : vector<8x64xf32>
    %c3 = arith.constant 3 : index
    %c0_61 = arith.constant 0 : index
    %c0_62 = arith.constant 0 : index
    %103 = vector.load %arg3[%c3, %c0_61, %c0_62] : memref<8x64x8xbf16, #tpu.memory_space<vmem>>, vector<1x64x8xbf16>
    %104 = vector.shape_cast %103 : vector<1x64x8xbf16> to vector<64x8xbf16>
    %cst_63 = arith.constant dense<0.000000e+00> : vector<8x8xf32>
    %105 = tpu.matmul %8, %104, %cst_63 {dimension_numbers = #tpu.dot_dimension_numbers<[1], [0], [0], [1], [0, 0, 1, 1], [], []>} : vector<8x64xbf16>, vector<64x8xbf16>, vector<8x8xf32> -> vector<8x8xf32>
    %c3_64 = arith.constant 3 : index
    %c0_65 = arith.constant 0 : index
    %c0_66 = arith.constant 0 : index
    %106 = vector.load %arg4[%c3_64, %c0_65, %c0_66] : memref<8x1x8xf32, #tpu.memory_space<vmem>>, vector<1x1x8xf32>
    %107 = vector.shape_cast %106 : vector<1x1x8xf32> to vector<1x8xf32>
    %108 = vector.broadcast %107 : vector<1x8xf32> to vector<8x8xf32>
    %109 = arith.addf %105, %108 : vector<8x8xf32>
    %110 = arith.truncf %109 : vector<8x8xf32> to vector<8x8xbf16>
    %cst_67 = arith.constant 0.000000e+00 : f32
    %111 = vector.broadcast %cst_67 : f32 to vector<8x8xf32>
    %c24 = arith.constant 24 : index
    %c0_68 = arith.constant 0 : index
    %112 = vector.load %arg12[%c24, %c0_68] : memref<64x8xbf16, #tpu.memory_space<vmem>>, vector<8x8xbf16>
    %c24_69 = arith.constant 24 : index
    %c0_70 = arith.constant 0 : index
    %113 = vector.load %arg13[%c24_69, %c0_70] : memref<64x8xbf16, #tpu.memory_space<vmem>>, vector<8x8xbf16>
    %cst_71 = arith.constant dense<0.000000e+00> : vector<8x8xf32>
    %114 = tpu.matmul %110, %112, %cst_71 {dimension_numbers = #tpu.dot_dimension_numbers<[1], [0], [0], [1], [0, 0, 1, 1], [], []>} : vector<8x8xbf16>, vector<8x8xbf16>, vector<8x8xf32> -> vector<8x8xf32>
    %cst_72 = arith.constant 0.353553385 : f32
    %115 = vector.broadcast %cst_72 : f32 to vector<8x8xf32>
    %116 = arith.mulf %114, %115 : vector<8x8xf32>
    %cst_73 = arith.constant dense<0xFF800000> : vector<8xf32>
    %117 = vector.multi_reduction <maximumf>, %116, %cst_73 [1] : vector<8x8xf32> to vector<8xf32>
    %118 = vector.shape_cast %117 : vector<8xf32> to vector<8x1xf32>
    %119 = vector.broadcast %118 : vector<8x1xf32> to vector<8x8xf32>
    %120 = arith.subf %116, %119 : vector<8x8xf32>
    %121 = math.exp %120 : vector<8x8xf32>
    %cst_74 = arith.constant dense<0.000000e+00> : vector<8xf32>
    %122 = vector.multi_reduction <add>, %121, %cst_74 [1] : vector<8x8xf32> to vector<8xf32>
    %123 = vector.shape_cast %122 : vector<8xf32> to vector<8x1xf32>
    %124 = vector.broadcast %123 : vector<8x1xf32> to vector<8x8xf32>
    %125 = arith.divf %121, %124 : vector<8x8xf32>
    %126 = arith.truncf %125 : vector<8x8xf32> to vector<8x8xbf16>
    %cst_75 = arith.constant dense<0.000000e+00> : vector<8x8xf32>
    %127 = tpu.matmul %126, %113, %cst_75 {dimension_numbers = #tpu.dot_dimension_numbers<[1], [1], [0], [0], [0, 0, 1, 0], [], []>} : vector<8x8xbf16>, vector<8x8xbf16>, vector<8x8xf32> -> vector<8x8xf32>
    %128 = arith.addf %111, %127 : vector<8x8xf32>
    %129 = arith.truncf %128 : vector<8x8xf32> to vector<8x8xbf16>
    %c3_76 = arith.constant 3 : index
    %c0_77 = arith.constant 0 : index
    %c0_78 = arith.constant 0 : index
    %130 = vector.load %arg9[%c3_76, %c0_77, %c0_78] : memref<8x8x64xbf16, #tpu.memory_space<vmem>>, vector<1x8x64xbf16>
    %131 = vector.shape_cast %130 : vector<1x8x64xbf16> to vector<8x64xbf16>
    %cst_79 = arith.constant dense<0.000000e+00> : vector<8x64xf32>
    %132 = tpu.matmul %129, %131, %cst_79 {dimension_numbers = #tpu.dot_dimension_numbers<[1], [0], [0], [1], [0, 0, 1, 1], [], []>} : vector<8x8xbf16>, vector<8x64xbf16>, vector<8x64xf32> -> vector<8x64xf32>
    %133 = arith.addf %102, %132 : vector<8x64xf32>
    %c4 = arith.constant 4 : index
    %c0_80 = arith.constant 0 : index
    %c0_81 = arith.constant 0 : index
    %134 = vector.load %arg3[%c4, %c0_80, %c0_81] : memref<8x64x8xbf16, #tpu.memory_space<vmem>>, vector<1x64x8xbf16>
    %135 = vector.shape_cast %134 : vector<1x64x8xbf16> to vector<64x8xbf16>
    %cst_82 = arith.constant dense<0.000000e+00> : vector<8x8xf32>
    %136 = tpu.matmul %8, %135, %cst_82 {dimension_numbers = #tpu.dot_dimension_numbers<[1], [0], [0], [1], [0, 0, 1, 1], [], []>} : vector<8x64xbf16>, vector<64x8xbf16>, vector<8x8xf32> -> vector<8x8xf32>
    %c4_83 = arith.constant 4 : index
    %c0_84 = arith.constant 0 : index
    %c0_85 = arith.constant 0 : index
    %137 = vector.load %arg4[%c4_83, %c0_84, %c0_85] : memref<8x1x8xf32, #tpu.memory_space<vmem>>, vector<1x1x8xf32>
    %138 = vector.shape_cast %137 : vector<1x1x8xf32> to vector<1x8xf32>
    %139 = vector.broadcast %138 : vector<1x8xf32> to vector<8x8xf32>
    %140 = arith.addf %136, %139 : vector<8x8xf32>
    %141 = arith.truncf %140 : vector<8x8xf32> to vector<8x8xbf16>
    %cst_86 = arith.constant 0.000000e+00 : f32
    %142 = vector.broadcast %cst_86 : f32 to vector<8x8xf32>
    %c32 = arith.constant 32 : index
    %c0_87 = arith.constant 0 : index
    %143 = vector.load %arg12[%c32, %c0_87] : memref<64x8xbf16, #tpu.memory_space<vmem>>, vector<8x8xbf16>
    %c32_88 = arith.constant 32 : index
    %c0_89 = arith.constant 0 : index
    %144 = vector.load %arg13[%c32_88, %c0_89] : memref<64x8xbf16, #tpu.memory_space<vmem>>, vector<8x8xbf16>
    %cst_90 = arith.constant dense<0.000000e+00> : vector<8x8xf32>
    %145 = tpu.matmul %141, %143, %cst_90 {dimension_numbers = #tpu.dot_dimension_numbers<[1], [0], [0], [1], [0, 0, 1, 1], [], []>} : vector<8x8xbf16>, vector<8x8xbf16>, vector<8x8xf32> -> vector<8x8xf32>
    %cst_91 = arith.constant 0.353553385 : f32
    %146 = vector.broadcast %cst_91 : f32 to vector<8x8xf32>
    %147 = arith.mulf %145, %146 : vector<8x8xf32>
    %cst_92 = arith.constant dense<0xFF800000> : vector<8xf32>
    %148 = vector.multi_reduction <maximumf>, %147, %cst_92 [1] : vector<8x8xf32> to vector<8xf32>
    %149 = vector.shape_cast %148 : vector<8xf32> to vector<8x1xf32>
    %150 = vector.broadcast %149 : vector<8x1xf32> to vector<8x8xf32>
    %151 = arith.subf %147, %150 : vector<8x8xf32>
    %152 = math.exp %151 : vector<8x8xf32>
    %cst_93 = arith.constant dense<0.000000e+00> : vector<8xf32>
    %153 = vector.multi_reduction <add>, %152, %cst_93 [1] : vector<8x8xf32> to vector<8xf32>
    %154 = vector.shape_cast %153 : vector<8xf32> to vector<8x1xf32>
    %155 = vector.broadcast %154 : vector<8x1xf32> to vector<8x8xf32>
    %156 = arith.divf %152, %155 : vector<8x8xf32>
    %157 = arith.truncf %156 : vector<8x8xf32> to vector<8x8xbf16>
    %cst_94 = arith.constant dense<0.000000e+00> : vector<8x8xf32>
    %158 = tpu.matmul %157, %144, %cst_94 {dimension_numbers = #tpu.dot_dimension_numbers<[1], [1], [0], [0], [0, 0, 1, 0], [], []>} : vector<8x8xbf16>, vector<8x8xbf16>, vector<8x8xf32> -> vector<8x8xf32>
    %159 = arith.addf %142, %158 : vector<8x8xf32>
    %160 = arith.truncf %159 : vector<8x8xf32> to vector<8x8xbf16>
    %c4_95 = arith.constant 4 : index
    %c0_96 = arith.constant 0 : index
    %c0_97 = arith.constant 0 : index
    %161 = vector.load %arg9[%c4_95, %c0_96, %c0_97] : memref<8x8x64xbf16, #tpu.memory_space<vmem>>, vector<1x8x64xbf16>
    %162 = vector.shape_cast %161 : vector<1x8x64xbf16> to vector<8x64xbf16>
    %cst_98 = arith.constant dense<0.000000e+00> : vector<8x64xf32>
    %163 = tpu.matmul %160, %162, %cst_98 {dimension_numbers = #tpu.dot_dimension_numbers<[1], [0], [0], [1], [0, 0, 1, 1], [], []>} : vector<8x8xbf16>, vector<8x64xbf16>, vector<8x64xf32> -> vector<8x64xf32>
    %164 = arith.addf %133, %163 : vector<8x64xf32>
    %c5 = arith.constant 5 : index
    %c0_99 = arith.constant 0 : index
    %c0_100 = arith.constant 0 : index
    %165 = vector.load %arg3[%c5, %c0_99, %c0_100] : memref<8x64x8xbf16, #tpu.memory_space<vmem>>, vector<1x64x8xbf16>
    %166 = vector.shape_cast %165 : vector<1x64x8xbf16> to vector<64x8xbf16>
    %cst_101 = arith.constant dense<0.000000e+00> : vector<8x8xf32>
    %167 = tpu.matmul %8, %166, %cst_101 {dimension_numbers = #tpu.dot_dimension_numbers<[1], [0], [0], [1], [0, 0, 1, 1], [], []>} : vector<8x64xbf16>, vector<64x8xbf16>, vector<8x8xf32> -> vector<8x8xf32>
    %c5_102 = arith.constant 5 : index
    %c0_103 = arith.constant 0 : index
    %c0_104 = arith.constant 0 : index
    %168 = vector.load %arg4[%c5_102, %c0_103, %c0_104] : memref<8x1x8xf32, #tpu.memory_space<vmem>>, vector<1x1x8xf32>
    %169 = vector.shape_cast %168 : vector<1x1x8xf32> to vector<1x8xf32>
    %170 = vector.broadcast %169 : vector<1x8xf32> to vector<8x8xf32>
    %171 = arith.addf %167, %170 : vector<8x8xf32>
    %172 = arith.truncf %171 : vector<8x8xf32> to vector<8x8xbf16>
    %cst_105 = arith.constant 0.000000e+00 : f32
    %173 = vector.broadcast %cst_105 : f32 to vector<8x8xf32>
    %c40 = arith.constant 40 : index
    %c0_106 = arith.constant 0 : index
    %174 = vector.load %arg12[%c40, %c0_106] : memref<64x8xbf16, #tpu.memory_space<vmem>>, vector<8x8xbf16>
    %c40_107 = arith.constant 40 : index
    %c0_108 = arith.constant 0 : index
    %175 = vector.load %arg13[%c40_107, %c0_108] : memref<64x8xbf16, #tpu.memory_space<vmem>>, vector<8x8xbf16>
    %cst_109 = arith.constant dense<0.000000e+00> : vector<8x8xf32>
    %176 = tpu.matmul %172, %174, %cst_109 {dimension_numbers = #tpu.dot_dimension_numbers<[1], [0], [0], [1], [0, 0, 1, 1], [], []>} : vector<8x8xbf16>, vector<8x8xbf16>, vector<8x8xf32> -> vector<8x8xf32>
    %cst_110 = arith.constant 0.353553385 : f32
    %177 = vector.broadcast %cst_110 : f32 to vector<8x8xf32>
    %178 = arith.mulf %176, %177 : vector<8x8xf32>
    %cst_111 = arith.constant dense<0xFF800000> : vector<8xf32>
    %179 = vector.multi_reduction <maximumf>, %178, %cst_111 [1] : vector<8x8xf32> to vector<8xf32>
    %180 = vector.shape_cast %179 : vector<8xf32> to vector<8x1xf32>
    %181 = vector.broadcast %180 : vector<8x1xf32> to vector<8x8xf32>
    %182 = arith.subf %178, %181 : vector<8x8xf32>
    %183 = math.exp %182 : vector<8x8xf32>
    %cst_112 = arith.constant dense<0.000000e+00> : vector<8xf32>
    %184 = vector.multi_reduction <add>, %183, %cst_112 [1] : vector<8x8xf32> to vector<8xf32>
    %185 = vector.shape_cast %184 : vector<8xf32> to vector<8x1xf32>
    %186 = vector.broadcast %185 : vector<8x1xf32> to vector<8x8xf32>
    %187 = arith.divf %183, %186 : vector<8x8xf32>
    %188 = arith.truncf %187 : vector<8x8xf32> to vector<8x8xbf16>
    %cst_113 = arith.constant dense<0.000000e+00> : vector<8x8xf32>
    %189 = tpu.matmul %188, %175, %cst_113 {dimension_numbers = #tpu.dot_dimension_numbers<[1], [1], [0], [0], [0, 0, 1, 0], [], []>} : vector<8x8xbf16>, vector<8x8xbf16>, vector<8x8xf32> -> vector<8x8xf32>
    %190 = arith.addf %173, %189 : vector<8x8xf32>
    %191 = arith.truncf %190 : vector<8x8xf32> to vector<8x8xbf16>
    %c5_114 = arith.constant 5 : index
    %c0_115 = arith.constant 0 : index
    %c0_116 = arith.constant 0 : index
    %192 = vector.load %arg9[%c5_114, %c0_115, %c0_116] : memref<8x8x64xbf16, #tpu.memory_space<vmem>>, vector<1x8x64xbf16>
    %193 = vector.shape_cast %192 : vector<1x8x64xbf16> to vector<8x64xbf16>
    %cst_117 = arith.constant dense<0.000000e+00> : vector<8x64xf32>
    %194 = tpu.matmul %191, %193, %cst_117 {dimension_numbers = #tpu.dot_dimension_numbers<[1], [0], [0], [1], [0, 0, 1, 1], [], []>} : vector<8x8xbf16>, vector<8x64xbf16>, vector<8x64xf32> -> vector<8x64xf32>
    %195 = arith.addf %164, %194 : vector<8x64xf32>
    %c6 = arith.constant 6 : index
    %c0_118 = arith.constant 0 : index
    %c0_119 = arith.constant 0 : index
    %196 = vector.load %arg3[%c6, %c0_118, %c0_119] : memref<8x64x8xbf16, #tpu.memory_space<vmem>>, vector<1x64x8xbf16>
    %197 = vector.shape_cast %196 : vector<1x64x8xbf16> to vector<64x8xbf16>
    %cst_120 = arith.constant dense<0.000000e+00> : vector<8x8xf32>
    %198 = tpu.matmul %8, %197, %cst_120 {dimension_numbers = #tpu.dot_dimension_numbers<[1], [0], [0], [1], [0, 0, 1, 1], [], []>} : vector<8x64xbf16>, vector<64x8xbf16>, vector<8x8xf32> -> vector<8x8xf32>
    %c6_121 = arith.constant 6 : index
    %c0_122 = arith.constant 0 : index
    %c0_123 = arith.constant 0 : index
    %199 = vector.load %arg4[%c6_121, %c0_122, %c0_123] : memref<8x1x8xf32, #tpu.memory_space<vmem>>, vector<1x1x8xf32>
    %200 = vector.shape_cast %199 : vector<1x1x8xf32> to vector<1x8xf32>
    %201 = vector.broadcast %200 : vector<1x8xf32> to vector<8x8xf32>
    %202 = arith.addf %198, %201 : vector<8x8xf32>
    %203 = arith.truncf %202 : vector<8x8xf32> to vector<8x8xbf16>
    %cst_124 = arith.constant 0.000000e+00 : f32
    %204 = vector.broadcast %cst_124 : f32 to vector<8x8xf32>
    %c48 = arith.constant 48 : index
    %c0_125 = arith.constant 0 : index
    %205 = vector.load %arg12[%c48, %c0_125] : memref<64x8xbf16, #tpu.memory_space<vmem>>, vector<8x8xbf16>
    %c48_126 = arith.constant 48 : index
    %c0_127 = arith.constant 0 : index
    %206 = vector.load %arg13[%c48_126, %c0_127] : memref<64x8xbf16, #tpu.memory_space<vmem>>, vector<8x8xbf16>
    %cst_128 = arith.constant dense<0.000000e+00> : vector<8x8xf32>
    %207 = tpu.matmul %203, %205, %cst_128 {dimension_numbers = #tpu.dot_dimension_numbers<[1], [0], [0], [1], [0, 0, 1, 1], [], []>} : vector<8x8xbf16>, vector<8x8xbf16>, vector<8x8xf32> -> vector<8x8xf32>
    %cst_129 = arith.constant 0.353553385 : f32
    %208 = vector.broadcast %cst_129 : f32 to vector<8x8xf32>
    %209 = arith.mulf %207, %208 : vector<8x8xf32>
    %cst_130 = arith.constant dense<0xFF800000> : vector<8xf32>
    %210 = vector.multi_reduction <maximumf>, %209, %cst_130 [1] : vector<8x8xf32> to vector<8xf32>
    %211 = vector.shape_cast %210 : vector<8xf32> to vector<8x1xf32>
    %212 = vector.broadcast %211 : vector<8x1xf32> to vector<8x8xf32>
    %213 = arith.subf %209, %212 : vector<8x8xf32>
    %214 = math.exp %213 : vector<8x8xf32>
    %cst_131 = arith.constant dense<0.000000e+00> : vector<8xf32>
    %215 = vector.multi_reduction <add>, %214, %cst_131 [1] : vector<8x8xf32> to vector<8xf32>
    %216 = vector.shape_cast %215 : vector<8xf32> to vector<8x1xf32>
    %217 = vector.broadcast %216 : vector<8x1xf32> to vector<8x8xf32>
    %218 = arith.divf %214, %217 : vector<8x8xf32>
    %219 = arith.truncf %218 : vector<8x8xf32> to vector<8x8xbf16>
    %cst_132 = arith.constant dense<0.000000e+00> : vector<8x8xf32>
    %220 = tpu.matmul %219, %206, %cst_132 {dimension_numbers = #tpu.dot_dimension_numbers<[1], [1], [0], [0], [0, 0, 1, 0], [], []>} : vector<8x8xbf16>, vector<8x8xbf16>, vector<8x8xf32> -> vector<8x8xf32>
    %221 = arith.addf %204, %220 : vector<8x8xf32>
    %222 = arith.truncf %221 : vector<8x8xf32> to vector<8x8xbf16>
    %c6_133 = arith.constant 6 : index
    %c0_134 = arith.constant 0 : index
    %c0_135 = arith.constant 0 : index
    %223 = vector.load %arg9[%c6_133, %c0_134, %c0_135] : memref<8x8x64xbf16, #tpu.memory_space<vmem>>, vector<1x8x64xbf16>
    %224 = vector.shape_cast %223 : vector<1x8x64xbf16> to vector<8x64xbf16>
    %cst_136 = arith.constant dense<0.000000e+00> : vector<8x64xf32>
    %225 = tpu.matmul %222, %224, %cst_136 {dimension_numbers = #tpu.dot_dimension_numbers<[1], [0], [0], [1], [0, 0, 1, 1], [], []>} : vector<8x8xbf16>, vector<8x64xbf16>, vector<8x64xf32> -> vector<8x64xf32>
    %226 = arith.addf %195, %225 : vector<8x64xf32>
    %c7 = arith.constant 7 : index
    %c0_137 = arith.constant 0 : index
    %c0_138 = arith.constant 0 : index
    %227 = vector.load %arg3[%c7, %c0_137, %c0_138] : memref<8x64x8xbf16, #tpu.memory_space<vmem>>, vector<1x64x8xbf16>
    %228 = vector.shape_cast %227 : vector<1x64x8xbf16> to vector<64x8xbf16>
    %cst_139 = arith.constant dense<0.000000e+00> : vector<8x8xf32>
    %229 = tpu.matmul %8, %228, %cst_139 {dimension_numbers = #tpu.dot_dimension_numbers<[1], [0], [0], [1], [0, 0, 1, 1], [], []>} : vector<8x64xbf16>, vector<64x8xbf16>, vector<8x8xf32> -> vector<8x8xf32>
    %c7_140 = arith.constant 7 : index
    %c0_141 = arith.constant 0 : index
    %c0_142 = arith.constant 0 : index
    %230 = vector.load %arg4[%c7_140, %c0_141, %c0_142] : memref<8x1x8xf32, #tpu.memory_space<vmem>>, vector<1x1x8xf32>
    %231 = vector.shape_cast %230 : vector<1x1x8xf32> to vector<1x8xf32>
    %232 = vector.broadcast %231 : vector<1x8xf32> to vector<8x8xf32>
    %233 = arith.addf %229, %232 : vector<8x8xf32>
    %234 = arith.truncf %233 : vector<8x8xf32> to vector<8x8xbf16>
    %cst_143 = arith.constant 0.000000e+00 : f32
    %235 = vector.broadcast %cst_143 : f32 to vector<8x8xf32>
    %c56 = arith.constant 56 : index
    %c0_144 = arith.constant 0 : index
    %236 = vector.load %arg12[%c56, %c0_144] : memref<64x8xbf16, #tpu.memory_space<vmem>>, vector<8x8xbf16>
    %c56_145 = arith.constant 56 : index
    %c0_146 = arith.constant 0 : index
    %237 = vector.load %arg13[%c56_145, %c0_146] : memref<64x8xbf16, #tpu.memory_space<vmem>>, vector<8x8xbf16>
    %cst_147 = arith.constant dense<0.000000e+00> : vector<8x8xf32>
    %238 = tpu.matmul %234, %236, %cst_147 {dimension_numbers = #tpu.dot_dimension_numbers<[1], [0], [0], [1], [0, 0, 1, 1], [], []>} : vector<8x8xbf16>, vector<8x8xbf16>, vector<8x8xf32> -> vector<8x8xf32>
    %cst_148 = arith.constant 0.353553385 : f32
    %239 = vector.broadcast %cst_148 : f32 to vector<8x8xf32>
    %240 = arith.mulf %238, %239 : vector<8x8xf32>
    %cst_149 = arith.constant dense<0xFF800000> : vector<8xf32>
    %241 = vector.multi_reduction <maximumf>, %240, %cst_149 [1] : vector<8x8xf32> to vector<8xf32>
    %242 = vector.shape_cast %241 : vector<8xf32> to vector<8x1xf32>
    %243 = vector.broadcast %242 : vector<8x1xf32> to vector<8x8xf32>
    %244 = arith.subf %240, %243 : vector<8x8xf32>
    %245 = math.exp %244 : vector<8x8xf32>
    %cst_150 = arith.constant dense<0.000000e+00> : vector<8xf32>
    %246 = vector.multi_reduction <add>, %245, %cst_150 [1] : vector<8x8xf32> to vector<8xf32>
    %247 = vector.shape_cast %246 : vector<8xf32> to vector<8x1xf32>
    %248 = vector.broadcast %247 : vector<8x1xf32> to vector<8x8xf32>
    %249 = arith.divf %245, %248 : vector<8x8xf32>
    %250 = arith.truncf %249 : vector<8x8xf32> to vector<8x8xbf16>
    %cst_151 = arith.constant dense<0.000000e+00> : vector<8x8xf32>
    %251 = tpu.matmul %250, %237, %cst_151 {dimension_numbers = #tpu.dot_dimension_numbers<[1], [1], [0], [0], [0, 0, 1, 0], [], []>} : vector<8x8xbf16>, vector<8x8xbf16>, vector<8x8xf32> -> vector<8x8xf32>
    %252 = arith.addf %235, %251 : vector<8x8xf32>
    %253 = arith.truncf %252 : vector<8x8xf32> to vector<8x8xbf16>
    %c7_152 = arith.constant 7 : index
    %c0_153 = arith.constant 0 : index
    %c0_154 = arith.constant 0 : index
    %254 = vector.load %arg9[%c7_152, %c0_153, %c0_154] : memref<8x8x64xbf16, #tpu.memory_space<vmem>>, vector<1x8x64xbf16>
    %255 = vector.shape_cast %254 : vector<1x8x64xbf16> to vector<8x64xbf16>
    %cst_155 = arith.constant dense<0.000000e+00> : vector<8x64xf32>
    %256 = tpu.matmul %253, %255, %cst_155 {dimension_numbers = #tpu.dot_dimension_numbers<[1], [0], [0], [1], [0, 0, 1, 1], [], []>} : vector<8x8xbf16>, vector<8x64xbf16>, vector<8x64xf32> -> vector<8x64xf32>
    %257 = arith.addf %226, %256 : vector<8x64xf32>
    %c0_156 = arith.constant 0 : index
    %c0_157 = arith.constant 0 : index
    %258 = vector.load %arg10[%c0_156, %c0_157] : memref<1x64xf32, #tpu.memory_space<vmem>>, vector<1x64xf32>
    %259 = vector.broadcast %258 : vector<1x64xf32> to vector<8x64xf32>
    %260 = arith.addf %257, %259 : vector<8x64xf32>
    %c0_158 = arith.constant 0 : index
    %c0_159 = arith.constant 0 : index
    %c0_160 = arith.constant 0 : index
    %261 = vector.load %arg11[%c0_158, %c0_159, %c0_160] : memref<1x8x64xf32, #tpu.memory_space<vmem>>, vector<1x8x64xf32>
    %262 = vector.shape_cast %261 : vector<1x8x64xf32> to vector<8x64xf32>
    %263 = vector.shape_cast %260 : vector<8x64xf32> to vector<1x8x64xf32>
    tpu.vector_store %arg11[%c0_158, %c0_159, %c0_160], %263 {strides = array<i32>} : memref<1x8x64xf32, #tpu.memory_space<vmem>>, vector<1x8x64xf32>,
    return
  }
  func.func @transform_0(%arg0: i32, %arg1: i32) -> (i32, i32, i32) {
    %c0_i32 = arith.constant 0 : i32
    %c0_i32_0 = arith.constant 0 : i32
    %c0_i32_1 = arith.constant 0 : i32
    return %arg0, %c0_i32, %c0_i32_0 : i32, i32, i32
  }
  func.func @transform_1(%arg0: i32, %arg1: i32) -> (i32, i32, i32) {
    %c0_i32 = arith.constant 0 : i32
    %c0_i32_0 = arith.constant 0 : i32
    %c0_i32_1 = arith.constant 0 : i32
    %c0_i32_2 = arith.constant 0 : i32
    return %c0_i32, %c0_i32_0, %c0_i32_1 : i32, i32, i32
  }
  func.func @transform_2(%arg0: i32, %arg1: i32) -> (i32, i32, i32) {
    %c0_i32 = arith.constant 0 : i32
    %c0_i32_0 = arith.constant 0 : i32
    %c0_i32_1 = arith.constant 0 : i32
    %c0_i32_2 = arith.constant 0 : i32
    return %c0_i32, %c0_i32_0, %c0_i32_1 : i32, i32, i32
  }
  func.func @transform_3(%arg0: i32, %arg1: i32) -> (i32, i32) {
    %c0_i32 = arith.constant 0 : i32
    %c0_i32_0 = arith.constant 0 : i32
    %c0_i32_1 = arith.constant 0 : i32
    return %c0_i32, %c0_i32_0 : i32, i32
  }
  func.func @transform_4(%arg0: i32, %arg1: i32) -> (i32, i32) {
    %c0_i32 = arith.constant 0 : i32
    %c0_i32_0 = arith.constant 0 : i32
    %c0_i32_1 = arith.constant 0 : i32
    return %c0_i32, %c0_i32_0 : i32, i32
  }
  func.func @transform_5(%arg0: i32, %arg1: i32) -> (i32, i32) {
    %c0_i32 = arith.constant 0 : i32
    %c0_i32_0 = arith.constant 0 : i32
    %c0_i32_1 = arith.constant 0 : i32
    return %c0_i32, %c0_i32_0 : i32, i32
  }
  func.func @transform_6(%arg0: i32, %arg1: i32) -> (i32, i32) {
    %c0_i32 = arith.constant 0 : i32
    %c0_i32_0 = arith.constant 0 : i32
    %c0_i32_1 = arith.constant 0 : i32
    return %c0_i32, %c0_i32_0 : i32, i32
  }
  func.func @transform_7(%arg0: i32, %arg1: i32) -> (i32, i32, i32) {
    %c0_i32 = arith.constant 0 : i32
    %c0_i32_0 = arith.constant 0 : i32
    %c0_i32_1 = arith.constant 0 : i32
    %c0_i32_2 = arith.constant 0 : i32
    return %c0_i32, %c0_i32_0, %c0_i32_1 : i32, i32, i32
  }
  func.func @transform_8(%arg0: i32, %arg1: i32) -> (i32, i32) {
    %c0_i32 = arith.constant 0 : i32
    %c0_i32_0 = arith.constant 0 : i32
    %c0_i32_1 = arith.constant 0 : i32
    return %c0_i32, %c0_i32_0 : i32, i32
  }
  func.func @transform_9(%arg0: i32, %arg1: i32) -> (i32, i32, i32) {
    %c0_i32 = arith.constant 0 : i32
    %c0_i32_0 = arith.constant 0 : i32
    return %arg0, %arg1, %c0_i32 : i32, i32, i32
  }
}

</mosaic_0001>

<llo_original>
// kernel: linear_attention_forward.1
$region0: #{linear_attention_forward.1}
  #allocation0 [shape = 'u32[]', space=smem, size = 0x4, offset = 0x4, fixed_abs, tag = 'smem constant byte address 0x4 - core index']
  #allocation1 [shape = 'u32[72,128]{1,0:T(1,128)}', space=vmem, size = 0x9000, scoped, tag = 'internal scratch']
  #allocation2 [shape = 'bf16[64,8]{1,0:T(8,128)(2,1)}', space=vmem, size = 0x4000, scoped, tag = 'scratch operand']
  #allocation3 [shape = 'bf16[64,8]{1,0:T(8,128)(2,1)}', space=vmem, size = 0x4000, scoped, tag = 'scratch operand']
  %s0 = inlined_call_operand.vmem [shape: f32[2,8,64], index: 0, kind: input, shape index: {}]
  %s1 = inlined_call_operand.vmem [shape: bf16[8,64,8], index: 1, kind: input, shape index: {}]
  %s2 = inlined_call_operand.vmem [shape: f32[8,1,8], index: 2, kind: input, shape index: {}]
  %s3 = inlined_call_operand.vmem [shape: bf16[64,64], index: 3, kind: input, shape index: {}]
  %s4 = inlined_call_operand.vmem [shape: f32[64,1], index: 4, kind: input, shape index: {}]
  %s5 = inlined_call_operand.vmem [shape: bf16[64,64], index: 5, kind: input, shape index: {}]
  %s6 = inlined_call_operand.vmem [shape: f32[64,1], index: 6, kind: input, shape index: {}]
  %s7 = inlined_call_operand.vmem [shape: bf16[8,8,64], index: 7, kind: input, shape index: {}]
  %s8 = inlined_call_operand.vmem [shape: f32[1,64], index: 8, kind: input, shape index: {}]
  %s9 = inlined_call_operand.hbm [shape: f32[2,8,64], index: 9, kind: output, shape index: {}]
  %s10 = sld [smem:[#allocation0]]
  $region73: #{linear_attention_forward.1} parent=0
    _
  %s12 = ssub.s32 1, %s10
  %s13 = scalar_select 0, %s12, %s10
  $region1: #{linear_attention_forward.1} parent=0
    #allocation4 [shape = 'u8[8192]{0}', space=vmem, size = 0x2000, scoped, tag = 'output window, operand 0']
    #allocation5 [shape = 's32[2]{0}', space=sflag, size = 0x8, scoped, tag = 'scoped memory for linear_attention_forward.1']
    %14 = vsyncpa [#allocation5], 0
    %s15 = scalar_lea.sflag [#allocation5], 1
    %16 = vsyncpa %s15, 0
    loop: start=0, step=1, limit=4
    $region2: #{linear_attention_forward.1} parent=1 // loop_pre_header
      _
    $region3: #{linear_attention_forward.1} parent=1 // loop_header
      %s18 = sphi 0, %s22
      %p19 = scmp.ge.s32.totalorder %s18, 4
      %s25 = sphi 0, %s37
      %s26 = sphi 0, %s33
      %s27 = sphi 0, %s25
      %s28 = sphi 0, %s26
      %s29 = sphi 0, %s27
      %s30 = sphi 0, %s28
      %s40 = sphi 0, %s42
      %s43 = sphi 0, %s40
      %s44 = sphi 0, %s43
      %s60 = sphi 0, %s44
      %s64 = sphi 0, %s64
      %s66 = sphi 0, %s64
      %s67 = sphi 0, %s66
      %s81 = sphi 0, %s67
      %s85 = sphi 0, %s85
      %s87 = sphi 0, %s85
      %s88 = sphi 0, %s87
      %s102 = sphi 0, %s88
      %s106 = sphi 0, %s106
      %s108 = sphi 0, %s106
      %s109 = sphi 0, %s108
      %s123 = sphi 0, %s109
      %s127 = sphi 0, %s127
      %s129 = sphi 0, %s127
      %s130 = sphi 0, %s129
      %s144 = sphi 0, %s130
      %s148 = sphi 0, %s148
      %s150 = sphi 0, %s148
      %s151 = sphi 0, %s150
      %s165 = sphi 0, %s151
      %s169 = sphi 0, %s169
      %s171 = sphi 0, %s169
      %s172 = sphi 0, %s171
      %s186 = sphi 0, %s172
      %s190 = sphi 0, %s190
      %s192 = sphi 0, %s190
      %s193 = sphi 0, %s192
      %s207 = sphi 0, %s193
      %s211 = sphi 0, %s211
      %s213 = sphi 0, %s211
      %s214 = sphi 0, %s213
      %s228 = sphi 0, %s214
      %s236 = sphi 0, %s238
      %s239 = sphi 0, %s236
      %s240 = sphi 0, %s239
      %s256 = sphi 0, %s240
    $region4: #{linear_attention_forward.1} parent=1 // loop_header_branch
      %21 = sbr.rel (%p19) target = $region8
    $region5: #{linear_attention_forward.1} parent=1 // loop_body
      %s23 = ssub.s32 %s18, 1
      %s24 = ssub.s32 %s18, 2
      %s31 = sadd.s32 1, %s26
      %p32 = scmp.ge.s32.totalorder %s31, 1
      %s33 = scalar_select %p32, 0, %s31
      %s34 = sadd.s32 1, %s25
      %s35 = scalar_select %p32, %s34, %s25
      %p36 = scmp.ge.s32.totalorder %s35, 2
      %s37 = scalar_select %p36, 0, %s35
      %s38 = ssub.s32 %s25, %s37
      %p39 = scmp.eq.s32.totalorder %s38, 0
      %s41 = sadd.s32 %s40, 1
      %s42 = scalar_select %p39, %s40, %s41
      %p45 = pneg %p39
      %p46 = scmp.eq.s32.totalorder %s18, 1
      %p47 = por %p45, %p46
      %p48 = scmp.ne.s32.totalorder %s40, %s43
      %p49 = scmp.eq.s32.totalorder %s18, 0
      %p50 = por %p48, %p49
      %p51 = scmp.ne.s32.totalorder %s40, %s43
      %p52 = scmp.eq.s32.totalorder %s23, 1
      %p53 = por %p51, %p52
      %p54 = scmp.ne.s32.totalorder %s43, %s44
      %p55 = scmp.eq.s32.totalorder %s23, 0
      %p56 = por %p54, %p55
      %p57 = scmp.ne.s32.totalorder %s43, %s44
      %p58 = scmp.eq.s32.totalorder %s24, 1
      %p59 = por %p57, %p58
      %p61 = scmp.ne.s32.totalorder %s44, %s60
      %p62 = scmp.eq.s32.totalorder %s24, 0
      %p63 = por %p61, %p62
      %s65 = sadd.s32 %s64, 1
      %p68 = scmp.eq.s32.totalorder %s18, 1
      %p69 = scmp.ne.s32.totalorder %s64, %s66
      %p70 = scmp.eq.s32.totalorder %s18, 0
      %p71 = por %p69, %p70
      %p72 = scmp.ne.s32.totalorder %s64, %s66
      %p73 = scmp.eq.s32.totalorder %s23, 1
      %p74 = por %p72, %p73
      %p75 = scmp.ne.s32.totalorder %s66, %s67
      %p76 = scmp.eq.s32.totalorder %s23, 0
      %p77 = por %p75, %p76
      %p78 = scmp.ne.s32.totalorder %s66, %s67
      %p79 = scmp.eq.s32.totalorder %s24, 1
      %p80 = por %p78, %p79
      %p82 = scmp.ne.s32.totalorder %s67, %s81
      %p83 = scmp.eq.s32.totalorder %s24, 0
      %p84 = por %p82, %p83
      %s86 = sadd.s32 %s85, 1
      %p89 = scmp.eq.s32.totalorder %s18, 1
      %p90 = scmp.ne.s32.totalorder %s85, %s87
      %p91 = scmp.eq.s32.totalorder %s18, 0
      %p92 = por %p90, %p91
      %p93 = scmp.ne.s32.totalorder %s85, %s87
      %p94 = scmp.eq.s32.totalorder %s23, 1
      %p95 = por %p93, %p94
      %p96 = scmp.ne.s32.totalorder %s87, %s88
      %p97 = scmp.eq.s32.totalorder %s23, 0
      %p98 = por %p96, %p97
      %p99 = scmp.ne.s32.totalorder %s87, %s88
      %p100 = scmp.eq.s32.totalorder %s24, 1
      %p101 = por %p99, %p100
      %p103 = scmp.ne.s32.totalorder %s88, %s102
      %p104 = scmp.eq.s32.totalorder %s24, 0
      %p105 = por %p103, %p104
      %s107 = sadd.s32 %s106, 1
      %p110 = scmp.eq.s32.totalorder %s18, 1
      %p111 = scmp.ne.s32.totalorder %s106, %s108
      %p112 = scmp.eq.s32.totalorder %s18, 0
      %p113 = por %p111, %p112
      %p114 = scmp.ne.s32.totalorder %s106, %s108
      %p115 = scmp.eq.s32.totalorder %s23, 1
      %p116 = por %p114, %p115
      %p117 = scmp.ne.s32.totalorder %s108, %s109
      %p118 = scmp.eq.s32.totalorder %s23, 0
      %p119 = por %p117, %p118
      %p120 = scmp.ne.s32.totalorder %s108, %s109
      %p121 = scmp.eq.s32.totalorder %s24, 1
      %p122 = por %p120, %p121
      %p124 = scmp.ne.s32.totalorder %s109, %s123
      %p125 = scmp.eq.s32.totalorder %s24, 0
      %p126 = por %p124, %p125
      %s128 = sadd.s32 %s127, 1
      %p131 = scmp.eq.s32.totalorder %s18, 1
      %p132 = scmp.ne.s32.totalorder %s127, %s129
      %p133 = scmp.eq.s32.totalorder %s18, 0
      %p134 = por %p132, %p133
      %p135 = scmp.ne.s32.totalorder %s127, %s129
      %p136 = scmp.eq.s32.totalorder %s23, 1
      %p137 = por %p135, %p136
      %p138 = scmp.ne.s32.totalorder %s129, %s130
      %p139 = scmp.eq.s32.totalorder %s23, 0
      %p140 = por %p138, %p139
      %p141 = scmp.ne.s32.totalorder %s129, %s130
      %p142 = scmp.eq.s32.totalorder %s24, 1
      %p143 = por %p141, %p142
      %p145 = scmp.ne.s32.totalorder %s130, %s144
      %p146 = scmp.eq.s32.totalorder %s24, 0
      %p147 = por %p145, %p146
      %s149 = sadd.s32 %s148, 1
      %p152 = scmp.eq.s32.totalorder %s18, 1
      %p153 = scmp.ne.s32.totalorder %s148, %s150
      %p154 = scmp.eq.s32.totalorder %s18, 0
      %p155 = por %p153, %p154
      %p156 = scmp.ne.s32.totalorder %s148, %s150
      %p157 = scmp.eq.s32.totalorder %s23, 1
      %p158 = por %p156, %p157
      %p159 = scmp.ne.s32.totalorder %s150, %s151
      %p160 = scmp.eq.s32.totalorder %s23, 0
      %p161 = por %p159, %p160
      %p162 = scmp.ne.s32.totalorder %s150, %s151
      %p163 = scmp.eq.s32.totalorder %s24, 1
      %p164 = por %p162, %p163
      %p166 = scmp.ne.s32.totalorder %s151, %s165
      %p167 = scmp.eq.s32.totalorder %s24, 0
      %p168 = por %p166, %p167
      %s170 = sadd.s32 %s169, 1
      %p173 = scmp.eq.s32.totalorder %s18, 1
      %p174 = scmp.ne.s32.totalorder %s169, %s171
      %p175 = scmp.eq.s32.totalorder %s18, 0
      %p176 = por %p174, %p175
      %p177 = scmp.ne.s32.totalorder %s169, %s171
      %p178 = scmp.eq.s32.totalorder %s23, 1
      %p179 = por %p177, %p178
      %p180 = scmp.ne.s32.totalorder %s171, %s172
      %p181 = scmp.eq.s32.totalorder %s23, 0
      %p182 = por %p180, %p181
      %p183 = scmp.ne.s32.totalorder %s171, %s172
      %p184 = scmp.eq.s32.totalorder %s24, 1
      %p185 = por %p183, %p184
      %p187 = scmp.ne.s32.totalorder %s172, %s186
      %p188 = scmp.eq.s32.totalorder %s24, 0
      %p189 = por %p187, %p188
      %s191 = sadd.s32 %s190, 1
      %p194 = scmp.eq.s32.totalorder %s18, 1
      %p195 = scmp.ne.s32.totalorder %s190, %s192
      %p196 = scmp.eq.s32.totalorder %s18, 0
      %p197 = por %p195, %p196
      %p198 = scmp.ne.s32.totalorder %s190, %s192
      %p199 = scmp.eq.s32.totalorder %s23, 1
      %p200 = por %p198, %p199
      %p201 = scmp.ne.s32.totalorder %s192, %s193
      %p202 = scmp.eq.s32.totalorder %s23, 0
      %p203 = por %p201, %p202
      %p204 = scmp.ne.s32.totalorder %s192, %s193
      %p205 = scmp.eq.s32.totalorder %s24, 1
      %p206 = por %p204, %p205
      %p208 = scmp.ne.s32.totalorder %s193, %s207
      %p209 = scmp.eq.s32.totalorder %s24, 0
      %p210 = por %p208, %p209
      %s212 = sadd.s32 %s211, 1
      %p215 = scmp.eq.s32.totalorder %s18, 1
      %p216 = scmp.ne.s32.totalorder %s211, %s213
      %p217 = scmp.eq.s32.totalorder %s18, 0
      %p218 = por %p216, %p217
      %p219 = scmp.ne.s32.totalorder %s211, %s213
      %p220 = scmp.eq.s32.totalorder %s23, 1
      %p221 = por %p219, %p220
      %p222 = scmp.ne.s32.totalorder %s213, %s214
      %p223 = scmp.eq.s32.totalorder %s23, 0
      %p224 = por %p222, %p223
      %p225 = scmp.ne.s32.totalorder %s213, %s214
      %p226 = scmp.eq.s32.totalorder %s24, 1
      %p227 = por %p225, %p226
      %p229 = scmp.ne.s32.totalorder %s214, %s228
      %p230 = scmp.eq.s32.totalorder %s24, 0
      %p231 = por %p229, %p230
      %s232 = ssub.s32 %s25, %s37
      %s233 = ssub.s32 %s26, %s33
      %s234 = sor.u32 %s232, %s233
      %p235 = scmp.eq.s32.totalorder %s234, 0
      %s237 = sadd.s32 %s236, 1
      %s238 = scalar_select %p235, %s236, %s237
      %p241 = pneg %p235
      %p242 = scmp.eq.s32.totalorder %s18, 1
      %p243 = por %p241, %p242
      %p244 = scmp.ne.s32.totalorder %s236, %s239
      %p245 = scmp.eq.s32.totalorder %s18, 0
      %p246 = por %p244, %p245
      %p247 = scmp.ne.s32.totalorder %s236, %s239
      %p248 = scmp.eq.s32.totalorder %s23, 1
      %p249 = por %p247, %p248
      %p250 = scmp.ne.s32.totalorder %s239, %s240
      %p251 = scmp.eq.s32.totalorder %s23, 0
      %p252 = por %p250, %p251
      %p253 = scmp.ne.s32.totalorder %s239, %s240
      %p254 = scmp.eq.s32.totalorder %s24, 1
      %p255 = por %p253, %p254
      %p257 = scmp.ne.s32.totalorder %s240, %s256
      %p258 = scmp.eq.s32.totalorder %s24, 0
      %p259 = por %p257, %p258
      %p260 = scmp.le.s32.totalorder 1, %s18
      %p261 = scmp.lt.s32.totalorder %s18, 3
      %p262 = pnand %p260, %p261
      %p263 = pneg %p262
      // Predicated region
      $region9: #{linear_attention_forward.1} parent=5 // pred_check
        _
      $region10: #{linear_attention_forward.1} parent=5 // pred_check_branch
        %265 = sbr.rel (%p262) target = $region12
      $region11: #{linear_attention_forward.1} parent=5 // pred_region
        %s266 = ssub.s32 %s18, 1
        // Predicated region
        $region13: #{linear_attention_forward.1} parent=11 // pred_check
          %p267 = pneg %p77
        $region14: #{linear_attention_forward.1} parent=11 // pred_check_branch
          %269 = sbr.rel (%p267) target = $region16
        $region15: #{linear_attention_forward.1} parent=11 // pred_region
          _
        $region16: #{linear_attention_forward.1} parent=11 // pred_fallthru
          _
        // Predicated region
        $region17: #{linear_attention_forward.1} parent=11 // pred_check
          %p270 = pneg %p98
        $region18: #{linear_attention_forward.1} parent=11 // pred_check_branch
          %272 = sbr.rel (%p270) target = $region20
        $region19: #{linear_attention_forward.1} parent=11 // pred_region
          _
        $region20: #{linear_attention_forward.1} parent=11 // pred_fallthru
          _
        // Predicated region
        $region21: #{linear_attention_forward.1} parent=11 // pred_check
          %p273 = pneg %p119
        $region22: #{linear_attention_forward.1} parent=11 // pred_check_branch
          %275 = sbr.rel (%p273) target = $region24
        $region23: #{linear_attention_forward.1} parent=11 // pred_region
          _
        $region24: #{linear_attention_forward.1} parent=11 // pred_fallthru
          _
        // Predicated region
        $region25: #{linear_attention_forward.1} parent=11 // pred_check
          %p276 = pneg %p140
        $region26: #{linear_attention_forward.1} parent=11 // pred_check_branch
          %278 = sbr.rel (%p276) target = $region28
        $region27: #{linear_attention_forward.1} parent=11 // pred_region
          _
        $region28: #{linear_attention_forward.1} parent=11 // pred_fallthru
          _
        // Predicated region
        $region29: #{linear_attention_forward.1} parent=11 // pred_check
          %p279 = pneg %p161
        $region30: #{linear_attention_forward.1} parent=11 // pred_check_branch
          %281 = sbr.rel (%p279) target = $region32
        $region31: #{linear_attention_forward.1} parent=11 // pred_region
          _
        $region32: #{linear_attention_forward.1} parent=11 // pred_fallthru
          _
        // Predicated region
        $region33: #{linear_attention_forward.1} parent=11 // pred_check
          %p282 = pneg %p182
        $region34: #{linear_attention_forward.1} parent=11 // pred_check_branch
          %284 = sbr.rel (%p282) target = $region36
        $region35: #{linear_attention_forward.1} parent=11 // pred_region
          _
        $region36: #{linear_attention_forward.1} parent=11 // pred_fallthru
          _
        // Predicated region
        $region37: #{linear_attention_forward.1} parent=11 // pred_check
          %p285 = pneg %p203
        $region38: #{linear_attention_forward.1} parent=11 // pred_check_branch
          %287 = sbr.rel (%p285) target = $region40
        $region39: #{linear_attention_forward.1} parent=11 // pred_region
          _
        $region40: #{linear_attention_forward.1} parent=11 // pred_fallthru
          _
        // Predicated region
        $region41: #{linear_attention_forward.1} parent=11 // pred_check
          %p288 = pneg %p224
        $region42: #{linear_attention_forward.1} parent=11 // pred_check_branch
          %290 = sbr.rel (%p288) target = $region44
        $region43: #{linear_attention_forward.1} parent=11 // pred_region
          _
        $region44: #{linear_attention_forward.1} parent=11 // pred_fallthru
          _
      $region12: #{linear_attention_forward.1} parent=5 // pred_fallthru
        _
      %p291 = scmp.lt.s32.totalorder %s18, 2
      // Predicated region
      $region45: #{linear_attention_forward.1} parent=5 // pred_check
        %p292 = pneg %p291
      $region46: #{linear_attention_forward.1} parent=5 // pred_check_branch
        %294 = sbr.rel (%p292) target = $region48
      $region47: #{linear_attention_forward.1} parent=5 // pred_region
        // Predicated region
        $region49: #{linear_attention_forward.1} parent=47 // pred_check
          %p295 = pneg %p50
        $region50: #{linear_attention_forward.1} parent=47 // pred_check_branch
          %297 = sbr.rel (%p295) target = $region52
        $region51: #{linear_attention_forward.1} parent=47 // pred_region
          %p298 = scmp.lt.s32.totalorder %s25, 1
          %s299 = scalar_select %p298, %s25, 1
          %s300 = smul.addr %s299, 8
          %s301 = scalar_lea.vmem %s0, %s300
        $region52: #{linear_attention_forward.1} parent=47 // pred_fallthru
          _
      $region48: #{linear_attention_forward.1} parent=5 // pred_fallthru
        _
      %p302 = scmp.le.s32.totalorder 1, %s18
      %p303 = scmp.lt.s32.totalorder %s18, 3
      %p304 = pnand %p302, %p303
      %p305 = pneg %p304
      // Predicated region
      $region53: #{linear_attention_forward.1} parent=5 // pred_check
        _
      $region54: #{linear_attention_forward.1} parent=5 // pred_check_branch
        %307 = sbr.rel (%p304) target = $region56
      $region55: #{linear_attention_forward.1} parent=5 // pred_region
        %s308 = ssub.s32 %s18, 1
        %p309 = scmp.lt.s32.totalorder %s27, 1
        %s310 = scalar_select %p309, %s27, 1
        %s311 = smul.addr %s310, 8
        %s312 = scalar_lea.vmem %s0, %s311
        %p313 = pneg %p56
        %p314 = pneg %p53
        %p315 = pneg %p77
        %p316 = pneg %p74
        %p317 = pneg %p98
        %p318 = pneg %p95
        %p319 = pneg %p119
        %p320 = pneg %p116
        %p321 = pneg %p140
        %p322 = pneg %p137
        %p323 = pneg %p161
        %p324 = pneg %p158
        %p325 = pneg %p182
        %p326 = pneg %p179
        %p327 = pneg %p203
        %p328 = pneg %p200
        %p329 = pneg %p224
        %p330 = pneg %p221
        %p331 = pneg %p252
        %p332 = pneg %p249
        %s333 = sand.u32 %s239, 1
        %s334 = scalar_lea.sflag [#allocation5], %s333
        %s335 = sand.u32 %s239, 1
        %s336 = smul.addr %s335, 8
        %s337 = scalar_lea.vmem [#allocation4], %s336
        %p338 = scmp.lt.s32.totalorder %s27, 1
        %s339 = scalar_select %p338, %s27, 1
        %s340 = smul.addr %s339, 8
        %s341 = scalar_lea.vmem %s0, %s340
        %p343 = scmp.eq.s32.totalorder %s28, 0
        // Predicated region
        $region57: #{linear_attention_forward.1} parent=55 // pred_check
          %p344 = pneg %p343
        $region58: #{linear_attention_forward.1} parent=55 // pred_check_branch
          %346 = sbr.rel (%p344) target = $region60
        $region59: #{linear_attention_forward.1} parent=55 // pred_region
          %v347 = vld [vmem:[%s341] sm:$0xff]
          %v348 = vpack.c.bf16 %v347, %v347
          %v349 = vld [vmem:[%s3] sm:$0xf]
          %v350 = vld [vmem:[%s3 + $0x4] sm:$0xf]
          %v351 = vld [vmem:[%s3 + $0x8] sm:$0xf]
          %v352 = vld [vmem:[%s3 + $0xc] sm:$0xf]
          %v353 = vld [vmem:[%s3 + $0x10] sm:$0xf]
          %v354 = vld [vmem:[%s3 + $0x14] sm:$0xf]
          %v355 = vld [vmem:[%s3 + $0x18] sm:$0xf]
          %v356 = vld [vmem:[%s3 + $0x1c] sm:$0xf]
          %v357 = vld [vmem:[%s4] sm:$0xff]
          %v358 = vld [vmem:[%s4 + $0x8] sm:$0xff]
          %v359 = vld [vmem:[%s4 + $0x10] sm:$0xff]
          %v360 = vld [vmem:[%s4 + $0x18] sm:$0xff]
          %v361 = vld [vmem:[%s4 + $0x20] sm:$0xff]
          %v362 = vld [vmem:[%s4 + $0x28] sm:$0xff]
          %v363 = vld [vmem:[%s4 + $0x30] sm:$0xff]
          %v364 = vld [vmem:[%s4 + $0x38] sm:$0xff]
          %366 = vset.pattern.permute.xlu0 0
          %367 = vperm.xlu0 %366, %v357
          %v368 = vpop.permute.xlu0 %367
          %371 = vset.pattern.permute.xlu0 0
          %372 = vperm.xlu0 %371, %v358
          %v373 = vpop.permute.xlu0 %372
          %376 = vset.pattern.permute.xlu0 0
          %377 = vperm.xlu0 %376, %v359
          %v378 = vpop.permute.xlu0 %377
          %381 = vset.pattern.permute.xlu0 0
          %382 = vperm.xlu0 %381, %v360
          %v383 = vpop.permute.xlu0 %382
          %386 = vset.pattern.permute.xlu0 0
          %387 = vperm.xlu0 %386, %v361
          %v388 = vpop.permute.xlu0 %387
          %391 = vset.pattern.permute.xlu0 0
          %392 = vperm.xlu0 %391, %v362
          %v393 = vpop.permute.xlu0 %392
          %396 = vset.pattern.permute.xlu0 0
          %397 = vperm.xlu0 %396, %v363
          %v398 = vpop.permute.xlu0 %397
          %401 = vset.pattern.permute.xlu0 0
          %402 = vperm.xlu0 %401, %v364
          %v403 = vpop.permute.xlu0 %402
          %v413 = vunpack.c.l.b16 %v349
          %v414 = vunpack.c.l.b16 %v350
          %v415 = vunpack.c.l.b16 %v351
          %v416 = vunpack.c.l.b16 %v352
          %v417 = vunpack.c.l.b16 %v353
          %v418 = vunpack.c.l.b16 %v354
          %v419 = vunpack.c.l.b16 %v355
          %v420 = vunpack.c.l.b16 %v356
          %v421 = vpack.c.b16 %v414, %v413
          %v422 = vpack.c.b16 %v416, %v415
          %v423 = vpack.c.b16 %v418, %v417
          %v424 = vpack.c.b16 %v420, %v419
          %vm425 = vcmask 523264
          %v427 = vsel %vm425, %v421, 0
          %v430 = vsel %vm425, %v422, 0
          %v433 = vsel %vm425, %v423, 0
          %v436 = vsel %vm425, %v424, 0
          %v439 = vsel %vm425, %v348, 0
          %441 = vmatpush.bf16.xpose.msra.mxu0 0
          %442 = vmatpush.bf16.xpose.msra.mxu0 0
          %443 = vmatpush.bf16.xpose.msra.mxu0 0
          %444 = vmatpush.bf16.xpose.msra.mxu0 0
          %445 = vmatpush.bf16.xpose.msra.mxu0 0
          %446 = vmatpush.bf16.xpose.msra.mxu0 0
          %447 = vmatpush.bf16.xpose.msra.mxu0 0
          %448 = vmatpush.bf16.xpose.msra.mxu0 %v439
          %449 = vmatmul.bf16.gmra.mxu0 %v427
          %v450 = vpop.f32.mrf.mxu0
          %v451 = vadd.f32 %v368, %v450
          %v452 = vpop.f32.mrf.mxu0
          %v453 = vadd.f32 %v373, %v452
          %454 = vmatmul.bf16.gmra.mxu0 %v430
          %v455 = vpop.f32.mrf.mxu0
          %v456 = vadd.f32 %v378, %v455
          %v457 = vpop.f32.mrf.mxu0
          %v458 = vadd.f32 %v383, %v457
          %459 = vmatmul.bf16.gmra.mxu0 %v433
          %v460 = vpop.f32.mrf.mxu0
          %v461 = vadd.f32 %v388, %v460
          %v462 = vpop.f32.mrf.mxu0
          %v463 = vadd.f32 %v393, %v462
          %464 = vmatmul.bf16.gmra.mxu0 %v436
          %v465 = vpop.f32.mrf.mxu0
          %v466 = vadd.f32 %v398, %v465
          %v467 = vpop.f32.mrf.mxu0
          %v468 = vadd.f32 %v403, %v467
          %469 = vdwg.mxu0
          %v470 = vld [vmem:[%s5] sm:$0xf]
          %v471 = vld [vmem:[%s5 + $0x4] sm:$0xf]
          %v472 = vld [vmem:[%s5 + $0x8] sm:$0xf]
          %v473 = vld [vmem:[%s5 + $0xc] sm:$0xf]
          %v474 = vld [vmem:[%s5 + $0x10] sm:$0xf]
          %v475 = vld [vmem:[%s5 + $0x14] sm:$0xf]
          %v476 = vld [vmem:[%s5 + $0x18] sm:$0xf]
          %v477 = vld [vmem:[%s5 + $0x1c] sm:$0xf]
          %v478 = vld [vmem:[%s6] sm:$0xff]
          %v479 = vld [vmem:[%s6 + $0x8] sm:$0xff]
          %v480 = vld [vmem:[%s6 + $0x10] sm:$0xff]
          %v481 = vld [vmem:[%s6 + $0x18] sm:$0xff]
          %v482 = vld [vmem:[%s6 + $0x20] sm:$0xff]
          %v483 = vld [vmem:[%s6 + $0x28] sm:$0xff]
          %v484 = vld [vmem:[%s6 + $0x30] sm:$0xff]
          %v485 = vld [vmem:[%s6 + $0x38] sm:$0xff]
          %487 = vset.pattern.permute.xlu0 0
          %488 = vperm.xlu0 %487, %v478
          %v489 = vpop.permute.xlu0 %488
          %492 = vset.pattern.permute.xlu0 0
          %493 = vperm.xlu0 %492, %v479
          %v494 = vpop.permute.xlu0 %493
          %497 = vset.pattern.permute.xlu0 0
          %498 = vperm.xlu0 %497, %v480
          %v499 = vpop.permute.xlu0 %498
          %502 = vset.pattern.permute.xlu0 0
          %503 = vperm.xlu0 %502, %v481
          %v504 = vpop.permute.xlu0 %503
          %507 = vset.pattern.permute.xlu0 0
          %508 = vperm.xlu0 %507, %v482
          %v509 = vpop.permute.xlu0 %508
          %512 = vset.pattern.permute.xlu0 0
          %513 = vperm.xlu0 %512, %v483
          %v514 = vpop.permute.xlu0 %513
          %517 = vset.pattern.permute.xlu0 0
          %518 = vperm.xlu0 %517, %v484
          %v519 = vpop.permute.xlu0 %518
          %522 = vset.pattern.permute.xlu0 0
          %523 = vperm.xlu0 %522, %v485
          %v524 = vpop.permute.xlu0 %523
          %v534 = vunpack.c.l.b16 %v470
          %v535 = vunpack.c.l.b16 %v471
          %v536 = vunpack.c.l.b16 %v472
          %v537 = vunpack.c.l.b16 %v473
          %v538 = vunpack.c.l.b16 %v474
          %v539 = vunpack.c.l.b16 %v475
          %v540 = vunpack.c.l.b16 %v476
          %v541 = vunpack.c.l.b16 %v477
          %v542 = vpack.c.b16 %v535, %v534
          %v543 = vpack.c.b16 %v537, %v536
          %v544 = vpack.c.b16 %v539, %v538
          %v545 = vpack.c.b16 %v541, %v540
          %v547 = vsel %vm425, %v542, 0
          %v550 = vsel %vm425, %v543, 0
          %v553 = vsel %vm425, %v544, 0
          %v556 = vsel %vm425, %v545, 0
          %558 = vmatpush.bf16.xpose.msra.mxu0 0
          %559 = vmatpush.bf16.xpose.msra.mxu0 0
          %560 = vmatpush.bf16.xpose.msra.mxu0 0
          %561 = vmatpush.bf16.xpose.msra.mxu0 0
          %562 = vmatpush.bf16.xpose.msra.mxu0 0
          %563 = vmatpush.bf16.xpose.msra.mxu0 0
          %564 = vmatpush.bf16.xpose.msra.mxu0 0
          %565 = vmatpush.bf16.xpose.msra.mxu0 %v439
          %566 = vmatmul.bf16.gmra.mxu0 %v547
          %v567 = vpop.f32.mrf.mxu0
          %v568 = vadd.f32 %v489, %v567
          %v569 = vpop.f32.mrf.mxu0
          %v570 = vadd.f32 %v494, %v569
          %571 = vmatmul.bf16.gmra.mxu0 %v550
          %v572 = vpop.f32.mrf.mxu0
          %v573 = vadd.f32 %v499, %v572
          %v574 = vpop.f32.mrf.mxu0
          %v575 = vadd.f32 %v504, %v574
          %576 = vmatmul.bf16.gmra.mxu0 %v553
          %v577 = vpop.f32.mrf.mxu0
          %v578 = vadd.f32 %v509, %v577
          %v579 = vpop.f32.mrf.mxu0
          %v580 = vadd.f32 %v514, %v579
          %581 = vmatmul.bf16.gmra.mxu0 %v556
          %v582 = vpop.f32.mrf.mxu0
          %v583 = vadd.f32 %v519, %v582
          %v584 = vpop.f32.mrf.mxu0
          %v585 = vadd.f32 %v524, %v584
          %586 = vdwg.mxu0
          %v587 = vpack.c.bf16 %v451, %v451
          %v588 = vpack.c.bf16 %v453, %v453
          %v589 = vpack.c.bf16 %v456, %v456
          %v590 = vpack.c.bf16 %v458, %v458
          %v591 = vpack.c.bf16 %v461, %v461
          %v592 = vpack.c.bf16 %v463, %v463
          %v593 = vpack.c.bf16 %v466, %v466
          %v594 = vpack.c.bf16 %v468, %v468
          %vm595 = vcmask 60416
          %596 = vst.msk [vmem:[#allocation2] sm:$0xf] %vm595, %v587
          %597 = vst.msk [vmem:[#allocation2 + $0x4] sm:$0xf] %vm595, %v588
          %598 = vst.msk [vmem:[#allocation2 + $0x8] sm:$0xf] %vm595, %v589
          %599 = vst.msk [vmem:[#allocation2 + $0xc] sm:$0xf] %vm595, %v590
          %600 = vst.msk [vmem:[#allocation2 + $0x10] sm:$0xf] %vm595, %v591
          %601 = vst.msk [vmem:[#allocation2 + $0x14] sm:$0xf] %vm595, %v592
          %602 = vst.msk [vmem:[#allocation2 + $0x18] sm:$0xf] %vm595, %v593
          %603 = vst.msk [vmem:[#allocation2 + $0x1c] sm:$0xf] %vm595, %v594
          %v604 = vpack.c.bf16 %v568, %v568
          %v605 = vpack.c.bf16 %v570, %v570
          %v606 = vpack.c.bf16 %v573, %v573
          %v607 = vpack.c.bf16 %v575, %v575
          %v608 = vpack.c.bf16 %v578, %v578
          %v609 = vpack.c.bf16 %v580, %v580
          %v610 = vpack.c.bf16 %v583, %v583
          %v611 = vpack.c.bf16 %v585, %v585
          %612 = vst.msk [vmem:[#allocation3] sm:$0xf] %vm595, %v604
          %613 = vst.msk [vmem:[#allocation3 + $0x4] sm:$0xf] %vm595, %v605
          %614 = vst.msk [vmem:[#allocation3 + $0x8] sm:$0xf] %vm595, %v606
          %615 = vst.msk [vmem:[#allocation3 + $0xc] sm:$0xf] %vm595, %v607
          %616 = vst.msk [vmem:[#allocation3 + $0x10] sm:$0xf] %vm595, %v608
          %617 = vst.msk [vmem:[#allocation3 + $0x14] sm:$0xf] %vm595, %v609
          %618 = vst.msk [vmem:[#allocation3 + $0x18] sm:$0xf] %vm595, %v610
          %619 = vst.msk [vmem:[#allocation3 + $0x1c] sm:$0xf] %vm595, %v611
        $region60: #{linear_attention_forward.1} parent=55 // pred_fallthru
          _
        %s620 = smul.u32 %s28, 8
        %s621 = scalar_lea.vmem %s341, %s620
        %v622 = vld [vmem:[%s621] sm:$0xff]
        %v623 = vpack.c.bf16 %v622, %v622
        %v624 = vld [vmem:[%s1] sm:$0xf]
        %v625 = vld [vmem:[%s1 + $0x4] sm:$0xf]
        %v626 = vld [vmem:[%s1 + $0x8] sm:$0xf]
        %v627 = vld [vmem:[%s1 + $0xc] sm:$0xf]
        %v628 = vld [vmem:[%s1 + $0x10] sm:$0xf]
        %v629 = vld [vmem:[%s1 + $0x14] sm:$0xf]
        %v630 = vld [vmem:[%s1 + $0x18] sm:$0xf]
        %v631 = vld [vmem:[%s1 + $0x1c] sm:$0xf]
        %v632 = vld [vmem:[%s2] sm:$0x1]
        %v634 = vperm.slane %v632, 0
        %v644 = vunpack.c.l.b16 %v624
        %v645 = vunpack.c.l.b16 %v625
        %v646 = vunpack.c.l.b16 %v626
        %v647 = vunpack.c.l.b16 %v627
        %v648 = vunpack.c.l.b16 %v628
        %v649 = vunpack.c.l.b16 %v629
        %v650 = vunpack.c.l.b16 %v630
        %v651 = vunpack.c.l.b16 %v631
        %v652 = vpack.c.b16 %v645, %v644
        %v653 = vpack.c.b16 %v647, %v646
        %v654 = vpack.c.b16 %v649, %v648
        %v655 = vpack.c.b16 %v651, %v650
        %vm660 = vcmask 523264
        %v662 = vsel %vm660, %v623, 0
        %664 = vmatpush.bf16.msra.mxu0 0
        %665 = vmatpush.bf16.msra.mxu0 0
        %666 = vmatpush.bf16.msra.mxu0 0
        %667 = vmatpush.bf16.msra.mxu0 0
        %668 = vmatpush.bf16.msra.mxu0 %v655
        %669 = vmatpush.bf16.msra.mxu0 %v654
        %670 = vmatpush.bf16.msra.mxu0 %v653
        %671 = vmatpush.bf16.msra.mxu0 %v652
        %672 = vmatmul.bf16.gmra.mxu0 %v662
        %v673 = vpop.f32.mrf.mxu0
        %v674 = vadd.f32 %v634, %v673
        %v675 = vpop.f32.mrf.mxu0
        %676 = vdwg.mxu0
        %v677 = vpack.c.bf16 %v674, %v674
        %v678 = vld [vmem:[#allocation2] sm:$0xf]
        %v679 = vld [vmem:[#allocation3] sm:$0xf]
        %vm680 = vcmask 64512
        %v682 = vsel %vm680, %v677, 0
        %vm684 = vcmask 1043456
        %v686 = vsel %vm684, %v678, 0
        %688 = vmatpush.bf16.msra.mxu0 0
        %689 = vmatpush.bf16.msra.mxu0 0
        %690 = vmatpush.bf16.msra.mxu0 0
        %691 = vmatpush.bf16.msra.mxu0 0
        %692 = vmatpush.bf16.msra.mxu0 0
        %693 = vmatpush.bf16.msra.mxu0 0
        %694 = vmatpush.bf16.msra.mxu0 0
        %695 = vmatpush.bf16.msra.mxu0 %v686
        %696 = vmatmul.bf16.gmra.mxu0 %v682
        %v697 = vpop.f32.mrf.mxu0
        %v698 = vadd.f32 0.0, %v697
        %v699 = vpop.f32.mrf.mxu0
        %700 = vdwg.mxu0
        %v701 = vmul.f32 %v698, 0.35355338
        %v702 = vsel %vm680, %v701, -inf
        %703 = vmax.xlane.f32.xlu0 %v702
        %v704 = vpop.xlane.xlu0 %703
        %v705 = vsub.f32 %v701, %v704
        %v706 = vmul.f32 %v705, 1.442695
        %v707 = vpow.pop %v706
        %v708 = vsel %vm680, %v707, 0.0
        %709 = vadd.xlane.f32.xlu0 %v708
        %v710 = vpop.xlane.xlu0 %709
        %v711 = vrcp.pop %v710
        %v712 = vmul.f32 %v710, %v711
        %v713 = vsub.f32 1.0, %v712
        %v714 = vmul.f32 %v711, %v713
        %v715 = vadd.f32 %v711, %v714
        %vm716 = vweird.f32 %v710
        %vm717 = vweird.f32 %v711
        %vm718 = vmor %vm716, %vm717
        %v719 = vsel %vm718, %v711, %v715
        %v720 = vand.u32 2147483647, %v710
        %vm721 = vcmp.eq.f32.partialorder %v720, 8.507059e+37
        %v722 = vand.u32 %v710, 2147483648
        %v723 = vor.u32 1.1754944e-38, %v722
        %v724 = vsel %vm721, %v723, %v719
        %v725 = vmul.f32 %v707, %v724
        %v726 = vpack.c.bf16 %v725, %v725
        %v728 = vsel %vm680, %v726, 0
        %v731 = vsel %vm680, %v679, 0
        %733 = vmatpush.bf16.xpose.msra.mxu0 0
        %734 = vmatpush.bf16.xpose.msra.mxu0 0
        %735 = vmatpush.bf16.xpose.msra.mxu0 0
        %736 = vmatpush.bf16.xpose.msra.mxu0 0
        %737 = vmatpush.bf16.xpose.msra.mxu0 0
        %738 = vmatpush.bf16.xpose.msra.mxu0 0
        %739 = vmatpush.bf16.xpose.msra.mxu0 0
        %740 = vmatpush.bf16.xpose.msra.mxu0 %v731
        %741 = vmatmul.bf16.gmra.mxu0 %v728
        %v742 = vpop.f32.mrf.mxu0
        %v743 = vadd.f32 0.0, %v742
        %v744 = vpop.f32.mrf.mxu0
        %745 = vdwg.mxu0
        %v746 = vpack.c.bf16 %v743, %v743
        %v747 = vld [vmem:[%s7] sm:$0xf]
        %s748 = scalar_lea.vmem %s1, 32
        %v749 = vld [vmem:[%s748] sm:$0xf]
        %v750 = vld [vmem:[%s748 + $0x4] sm:$0xf]
        %v751 = vld [vmem:[%s748 + $0x8] sm:$0xf]
        %v752 = vld [vmem:[%s748 + $0xc] sm:$0xf]
        %v753 = vld [vmem:[%s748 + $0x10] sm:$0xf]
        %v754 = vld [vmem:[%s748 + $0x14] sm:$0xf]
        %v755 = vld [vmem:[%s748 + $0x18] sm:$0xf]
        %v756 = vld [vmem:[%s748 + $0x1c] sm:$0xf]
        %s757 = scalar_lea.vmem %s2, 1
        %v758 = vld [vmem:[%s757] sm:$0x1]
        %v760 = vperm.slane %v758, 0
        %v770 = vunpack.c.l.b16 %v749
        %v771 = vunpack.c.l.b16 %v750
        %v772 = vunpack.c.l.b16 %v751
        %v773 = vunpack.c.l.b16 %v752
        %v774 = vunpack.c.l.b16 %v753
        %v775 = vunpack.c.l.b16 %v754
        %v776 = vunpack.c.l.b16 %v755
        %v777 = vunpack.c.l.b16 %v756
        %v778 = vpack.c.b16 %v771, %v770
        %v779 = vpack.c.b16 %v773, %v772
        %v780 = vpack.c.b16 %v775, %v774
        %v781 = vpack.c.b16 %v777, %v776
        %786 = vmatpush.bf16.msra.mxu0 0
        %787 = vmatpush.bf16.msra.mxu0 0
        %788 = vmatpush.bf16.msra.mxu0 0
        %789 = vmatpush.bf16.msra.mxu0 0
        %790 = vmatpush.bf16.msra.mxu0 %v781
        %791 = vmatpush.bf16.msra.mxu0 %v780
        %792 = vmatpush.bf16.msra.mxu0 %v779
        %793 = vmatpush.bf16.msra.mxu0 %v778
        %794 = vmatmul.bf16.gmra.mxu0 %v662
        %v795 = vpop.f32.mrf.mxu0
        %v796 = vadd.f32 %v760, %v795
        %v797 = vpop.f32.mrf.mxu0
        %798 = vdwg.mxu0
        %v799 = vpack.c.bf16 %v796, %v796
        %v800 = vld [vmem:[#allocation2 + $0x4] sm:$0xf]
        %v801 = vld [vmem:[#allocation3 + $0x4] sm:$0xf]
        %v803 = vsel %vm680, %v799, 0
        %v806 = vsel %vm684, %v800, 0
        %808 = vmatpush.bf16.msra.mxu0 0
        %809 = vmatpush.bf16.msra.mxu0 0
        %810 = vmatpush.bf16.msra.mxu0 0
        %811 = vmatpush.bf16.msra.mxu0 0
        %812 = vmatpush.bf16.msra.mxu0 0
        %813 = vmatpush.bf16.msra.mxu0 0
        %814 = vmatpush.bf16.msra.mxu0 0
        %815 = vmatpush.bf16.msra.mxu0 %v806
        %816 = vmatmul.bf16.gmra.mxu0 %v803
        %v817 = vpop.f32.mrf.mxu0
        %v818 = vadd.f32 0.0, %v817
        %v819 = vpop.f32.mrf.mxu0
        %820 = vdwg.mxu0
        %v821 = vmul.f32 %v818, 0.35355338
        %v822 = vsel %vm680, %v821, -inf
        %823 = vmax.xlane.f32.xlu0 %v822
        %v824 = vpop.xlane.xlu0 %823
        %v825 = vsub.f32 %v821, %v824
        %v826 = vmul.f32 %v825, 1.442695
        %v827 = vpow.pop %v826
        %v828 = vsel %vm680, %v827, 0.0
        %829 = vadd.xlane.f32.xlu0 %v828
        %v830 = vpop.xlane.xlu0 %829
        %v831 = vrcp.pop %v830
        %v832 = vmul.f32 %v830, %v831
        %v833 = vsub.f32 1.0, %v832
        %v834 = vmul.f32 %v831, %v833
        %v835 = vadd.f32 %v831, %v834
        %vm836 = vweird.f32 %v830
        %vm837 = vweird.f32 %v831
        %vm838 = vmor %vm836, %vm837
        %v839 = vsel %vm838, %v831, %v835
        %v840 = vand.u32 2147483647, %v830
        %vm841 = vcmp.eq.f32.partialorder %v840, 8.507059e+37
        %v842 = vand.u32 %v830, 2147483648
        %v843 = vor.u32 1.1754944e-38, %v842
        %v844 = vsel %vm841, %v843, %v839
        %v845 = vmul.f32 %v827, %v844
        %v846 = vpack.c.bf16 %v845, %v845
        %v848 = vsel %vm680, %v846, 0
        %v851 = vsel %vm680, %v801, 0
        %853 = vmatpush.bf16.xpose.msra.mxu0 0
        %854 = vmatpush.bf16.xpose.msra.mxu0 0
        %855 = vmatpush.bf16.xpose.msra.mxu0 0
        %856 = vmatpush.bf16.xpose.msra.mxu0 0
        %857 = vmatpush.bf16.xpose.msra.mxu0 0
        %858 = vmatpush.bf16.xpose.msra.mxu0 0
        %859 = vmatpush.bf16.xpose.msra.mxu0 0
        %860 = vmatpush.bf16.xpose.msra.mxu0 %v851
        %861 = vmatmul.bf16.gmra.mxu0 %v848
        %v862 = vpop.f32.mrf.mxu0
        %v863 = vadd.f32 0.0, %v862
        %v864 = vpop.f32.mrf.mxu0
        %865 = vdwg.mxu0
        %v866 = vpack.c.bf16 %v863, %v863
        %s867 = scalar_lea.vmem %s7, 4
        %v868 = vld [vmem:[%s867] sm:$0xf]
        %v870 = vsel %vm680, %v866, 0
        %v873 = vsel %vm684, %v868, 0
        %875 = vmatpush.bf16.msra.mxu0 0
        %876 = vmatpush.bf16.msra.mxu0 0
        %877 = vmatpush.bf16.msra.mxu0 0
        %878 = vmatpush.bf16.msra.mxu0 0
        %879 = vmatpush.bf16.msra.mxu0 0
        %880 = vmatpush.bf16.msra.mxu0 0
        %881 = vmatpush.bf16.msra.mxu0 0
        %882 = vmatpush.bf16.msra.mxu0 %v873
        %883 = vmatmul.bf16.gmra.mxu0 %v870
        %v884 = vpop.f32.mrf.mxu0
        %v885 = vadd.f32 0.0, %v884
        %v886 = vpop.f32.mrf.mxu0
        %887 = vdwg.mxu0
        %v889 = vsel %vm680, %v746, 0
        %v892 = vsel %vm684, %v747, 0
        %894 = vmatpush.bf16.msra.mxu0 0
        %895 = vmatpush.bf16.msra.mxu0 0
        %896 = vmatpush.bf16.msra.mxu0 0
        %897 = vmatpush.bf16.msra.mxu0 0
        %898 = vmatpush.bf16.msra.mxu0 0
        %899 = vmatpush.bf16.msra.mxu0 0
        %900 = vmatpush.bf16.msra.mxu0 0
        %901 = vmatpush.bf16.msra.mxu0 %v892
        %902 = vmatmul.bf16.gmra.mxu0 %v889
        %v903 = vpop.f32.mrf.mxu0
        %v904 = vadd.f32 %v885, %v903
        %v905 = vpop.f32.mrf.mxu0
        %906 = vdwg.mxu0
        %s907 = scalar_lea.vmem %s1, 64
        %v908 = vld [vmem:[%s907] sm:$0xf]
        %v909 = vld [vmem:[%s907 + $0x4] sm:$0xf]
        %v910 = vld [vmem:[%s907 + $0x8] sm:$0xf]
        %v911 = vld [vmem:[%s907 + $0xc] sm:$0xf]
        %v912 = vld [vmem:[%s907 + $0x10] sm:$0xf]
        %v913 = vld [vmem:[%s907 + $0x14] sm:$0xf]
        %v914 = vld [vmem:[%s907 + $0x18] sm:$0xf]
        %v915 = vld [vmem:[%s907 + $0x1c] sm:$0xf]
        %s916 = scalar_lea.vmem %s2, 2
        %v917 = vld [vmem:[%s916] sm:$0x1]
        %v919 = vperm.slane %v917, 0
        %v929 = vunpack.c.l.b16 %v908
        %v930 = vunpack.c.l.b16 %v909
        %v931 = vunpack.c.l.b16 %v910
        %v932 = vunpack.c.l.b16 %v911
        %v933 = vunpack.c.l.b16 %v912
        %v934 = vunpack.c.l.b16 %v913
        %v935 = vunpack.c.l.b16 %v914
        %v936 = vunpack.c.l.b16 %v915
        %v937 = vpack.c.b16 %v930, %v929
        %v938 = vpack.c.b16 %v932, %v931
        %v939 = vpack.c.b16 %v934, %v933
        %v940 = vpack.c.b16 %v936, %v935
        %945 = vmatpush.bf16.msra.mxu0 0
        %946 = vmatpush.bf16.msra.mxu0 0
        %947 = vmatpush.bf16.msra.mxu0 0
        %948 = vmatpush.bf16.msra.mxu0 0
        %949 = vmatpush.bf16.msra.mxu0 %v940
        %950 = vmatpush.bf16.msra.mxu0 %v939
        %951 = vmatpush.bf16.msra.mxu0 %v938
        %952 = vmatpush.bf16.msra.mxu0 %v937
        %953 = vmatmul.bf16.gmra.mxu0 %v662
        %v954 = vpop.f32.mrf.mxu0
        %v955 = vadd.f32 %v919, %v954
        %v956 = vpop.f32.mrf.mxu0
        %957 = vdwg.mxu0
        %v958 = vpack.c.bf16 %v955, %v955
        %v959 = vld [vmem:[#allocation2 + $0x8] sm:$0xf]
        %v960 = vld [vmem:[#allocation3 + $0x8] sm:$0xf]
        %v962 = vsel %vm680, %v958, 0
        %v965 = vsel %vm684, %v959, 0
        %967 = vmatpush.bf16.msra.mxu0 0
        %968 = vmatpush.bf16.msra.mxu0 0
        %969 = vmatpush.bf16.msra.mxu0 0
        %970 = vmatpush.bf16.msra.mxu0 0
        %971 = vmatpush.bf16.msra.mxu0 0
        %972 = vmatpush.bf16.msra.mxu0 0
        %973 = vmatpush.bf16.msra.mxu0 0
        %974 = vmatpush.bf16.msra.mxu0 %v965
        %975 = vmatmul.bf16.gmra.mxu0 %v962
        %v976 = vpop.f32.mrf.mxu0
        %v977 = vadd.f32 0.0, %v976
        %v978 = vpop.f32.mrf.mxu0
        %979 = vdwg.mxu0
        %v980 = vmul.f32 %v977, 0.35355338
        %v981 = vsel %vm680, %v980, -inf
        %982 = vmax.xlane.f32.xlu0 %v981
        %v983 = vpop.xlane.xlu0 %982
        %v984 = vsub.f32 %v980, %v983
        %v985 = vmul.f32 %v984, 1.442695
        %v986 = vpow.pop %v985
        %v987 = vsel %vm680, %v986, 0.0
        %988 = vadd.xlane.f32.xlu0 %v987
        %v989 = vpop.xlane.xlu0 %988
        %v990 = vrcp.pop %v989
        %v991 = vmul.f32 %v989, %v990
        %v992 = vsub.f32 1.0, %v991
        %v993 = vmul.f32 %v990, %v992
        %v994 = vadd.f32 %v990, %v993
        %vm995 = vweird.f32 %v989
        %vm996 = vweird.f32 %v990
        %vm997 = vmor %vm995, %vm996
        %v998 = vsel %vm997, %v990, %v994
        %v999 = vand.u32 2147483647, %v989
        %vm1000 = vcmp.eq.f32.partialorder %v999, 8.507059e+37
        %v1001 = vand.u32 %v989, 2147483648
        %v1002 = vor.u32 1.1754944e-38, %v1001
        %v1003 = vsel %vm1000, %v1002, %v998
        %v1004 = vmul.f32 %v986, %v1003
        %v1005 = vpack.c.bf16 %v1004, %v1004
        %v1007 = vsel %vm680, %v1005, 0
        %v1010 = vsel %vm680, %v960, 0
        %1012 = vmatpush.bf16.xpose.msra.mxu0 0
        %1013 = vmatpush.bf16.xpose.msra.mxu0 0
        %1014 = vmatpush.bf16.xpose.msra.mxu0 0
        %1015 = vmatpush.bf16.xpose.msra.mxu0 0
        %1016 = vmatpush.bf16.xpose.msra.mxu0 0
        %1017 = vmatpush.bf16.xpose.msra.mxu0 0
        %1018 = vmatpush.bf16.xpose.msra.mxu0 0
        %1019 = vmatpush.bf16.xpose.msra.mxu0 %v1010
        %1020 = vmatmul.bf16.gmra.mxu0 %v1007
        %v1021 = vpop.f32.mrf.mxu0
        %v1022 = vadd.f32 0.0, %v1021
        %v1023 = vpop.f32.mrf.mxu0
        %1024 = vdwg.mxu0
        %v1025 = vpack.c.bf16 %v1022, %v1022
        %s1026 = scalar_lea.vmem %s7, 8
        %v1027 = vld [vmem:[%s1026] sm:$0xf]
        %v1029 = vsel %vm680, %v1025, 0
        %v1032 = vsel %vm684, %v1027, 0
        %1034 = vmatpush.bf16.msra.mxu0 0
        %1035 = vmatpush.bf16.msra.mxu0 0
        %1036 = vmatpush.bf16.msra.mxu0 0
        %1037 = vmatpush.bf16.msra.mxu0 0
        %1038 = vmatpush.bf16.msra.mxu0 0
        %1039 = vmatpush.bf16.msra.mxu0 0
        %1040 = vmatpush.bf16.msra.mxu0 0
        %1041 = vmatpush.bf16.msra.mxu0 %v1032
        %1042 = vmatmul.bf16.gmra.mxu0 %v1029
        %v1043 = vpop.f32.mrf.mxu0
        %v1044 = vadd.f32 0.0, %v1043
        %v1045 = vpop.f32.mrf.mxu0
        %1046 = vdwg.mxu0
        %v1047 = vadd.f32 %v904, %v1044
        %s1048 = scalar_lea.vmem %s1, 96
        %v1049 = vld [vmem:[%s1048] sm:$0xf]
        %v1050 = vld [vmem:[%s1048 + $0x4] sm:$0xf]
        %v1051 = vld [vmem:[%s1048 + $0x8] sm:$0xf]
        %v1052 = vld [vmem:[%s1048 + $0xc] sm:$0xf]
        %v1053 = vld [vmem:[%s1048 + $0x10] sm:$0xf]
        %v1054 = vld [vmem:[%s1048 + $0x14] sm:$0xf]
        %v1055 = vld [vmem:[%s1048 + $0x18] sm:$0xf]
        %v1056 = vld [vmem:[%s1048 + $0x1c] sm:$0xf]
        %s1057 = scalar_lea.vmem %s2, 3
        %v1058 = vld [vmem:[%s1057] sm:$0x1]
        %v1060 = vperm.slane %v1058, 0
        %v1070 = vunpack.c.l.b16 %v1049
        %v1071 = vunpack.c.l.b16 %v1050
        %v1072 = vunpack.c.l.b16 %v1051
        %v1073 = vunpack.c.l.b16 %v1052
        %v1074 = vunpack.c.l.b16 %v1053
        %v1075 = vunpack.c.l.b16 %v1054
        %v1076 = vunpack.c.l.b16 %v1055
        %v1077 = vunpack.c.l.b16 %v1056
        %v1078 = vpack.c.b16 %v1071, %v1070
        %v1079 = vpack.c.b16 %v1073, %v1072
        %v1080 = vpack.c.b16 %v1075, %v1074
        %v1081 = vpack.c.b16 %v1077, %v1076
        %1086 = vmatpush.bf16.msra.mxu0 0
        %1087 = vmatpush.bf16.msra.mxu0 0
        %1088 = vmatpush.bf16.msra.mxu0 0
        %1089 = vmatpush.bf16.msra.mxu0 0
        %1090 = vmatpush.bf16.msra.mxu0 %v1081
        %1091 = vmatpush.bf16.msra.mxu0 %v1080
        %1092 = vmatpush.bf16.msra.mxu0 %v1079
        %1093 = vmatpush.bf16.msra.mxu0 %v1078
        %1094 = vmatmul.bf16.gmra.mxu0 %v662
        %v1095 = vpop.f32.mrf.mxu0
        %v1096 = vadd.f32 %v1060, %v1095
        %v1097 = vpop.f32.mrf.mxu0
        %1098 = vdwg.mxu0
        %v1099 = vpack.c.bf16 %v1096, %v1096
        %v1100 = vld [vmem:[#allocation2 + $0xc] sm:$0xf]
        %v1101 = vld [vmem:[#allocation3 + $0xc] sm:$0xf]
        %v1103 = vsel %vm680, %v1099, 0
        %v1106 = vsel %vm684, %v1100, 0
        %1108 = vmatpush.bf16.msra.mxu0 0
        %1109 = vmatpush.bf16.msra.mxu0 0
        %1110 = vmatpush.bf16.msra.mxu0 0
        %1111 = vmatpush.bf16.msra.mxu0 0
        %1112 = vmatpush.bf16.msra.mxu0 0
        %1113 = vmatpush.bf16.msra.mxu0 0
        %1114 = vmatpush.bf16.msra.mxu0 0
        %1115 = vmatpush.bf16.msra.mxu0 %v1106
        %1116 = vmatmul.bf16.gmra.mxu0 %v1103
        %v1117 = vpop.f32.mrf.mxu0
        %v1118 = vadd.f32 0.0, %v1117
        %v1119 = vpop.f32.mrf.mxu0
        %1120 = vdwg.mxu0
        %v1121 = vmul.f32 %v1118, 0.35355338
        %v1122 = vsel %vm680, %v1121, -inf
        %1123 = vmax.xlane.f32.xlu0 %v1122
        %v1124 = vpop.xlane.xlu0 %1123
        %v1125 = vsub.f32 %v1121, %v1124
        %v1126 = vmul.f32 %v1125, 1.442695
        %v1127 = vpow.pop %v1126
        %v1128 = vsel %vm680, %v1127, 0.0
        %1129 = vadd.xlane.f32.xlu0 %v1128
        %v1130 = vpop.xlane.xlu0 %1129
        %v1131 = vrcp.pop %v1130
        %v1132 = vmul.f32 %v1130, %v1131
        %v1133 = vsub.f32 1.0, %v1132
        %v1134 = vmul.f32 %v1131, %v1133
        %v1135 = vadd.f32 %v1131, %v1134
        %vm1136 = vweird.f32 %v1130
        %vm1137 = vweird.f32 %v1131
        %vm1138 = vmor %vm1136, %vm1137
        %v1139 = vsel %vm1138, %v1131, %v1135
        %v1140 = vand.u32 2147483647, %v1130
        %vm1141 = vcmp.eq.f32.partialorder %v1140, 8.507059e+37
        %v1142 = vand.u32 %v1130, 2147483648
        %v1143 = vor.u32 1.1754944e-38, %v1142
        %v1144 = vsel %vm1141, %v1143, %v1139
        %v1145 = vmul.f32 %v1127, %v1144
        %v1146 = vpack.c.bf16 %v1145, %v1145
        %v1148 = vsel %vm680, %v1146, 0
        %v1151 = vsel %vm680, %v1101, 0
        %1153 = vmatpush.bf16.xpose.msra.mxu0 0
        %1154 = vmatpush.bf16.xpose.msra.mxu0 0
        %1155 = vmatpush.bf16.xpose.msra.mxu0 0
        %1156 = vmatpush.bf16.xpose.msra.mxu0 0
        %1157 = vmatpush.bf16.xpose.msra.mxu0 0
        %1158 = vmatpush.bf16.xpose.msra.mxu0 0
        %1159 = vmatpush.bf16.xpose.msra.mxu0 0
        %1160 = vmatpush.bf16.xpose.msra.mxu0 %v1151
        %1161 = vmatmul.bf16.gmra.mxu0 %v1148
        %v1162 = vpop.f32.mrf.mxu0
        %v1163 = vadd.f32 0.0, %v1162
        %v1164 = vpop.f32.mrf.mxu0
        %1165 = vdwg.mxu0
        %v1166 = vpack.c.bf16 %v1163, %v1163
        %s1167 = scalar_lea.vmem %s7, 12
        %v1168 = vld [vmem:[%s1167] sm:$0xf]
        %v1170 = vsel %vm680, %v1166, 0
        %v1173 = vsel %vm684, %v1168, 0
        %1175 = vmatpush.bf16.msra.mxu0 0
        %1176 = vmatpush.bf16.msra.mxu0 0
        %1177 = vmatpush.bf16.msra.mxu0 0
        %1178 = vmatpush.bf16.msra.mxu0 0
        %1179 = vmatpush.bf16.msra.mxu0 0
        %1180 = vmatpush.bf16.msra.mxu0 0
        %1181 = vmatpush.bf16.msra.mxu0 0
        %1182 = vmatpush.bf16.msra.mxu0 %v1173
        %1183 = vmatmul.bf16.gmra.mxu0 %v1170
        %v1184 = vpop.f32.mrf.mxu0
        %v1185 = vadd.f32 0.0, %v1184
        %v1186 = vpop.f32.mrf.mxu0
        %1187 = vdwg.mxu0
        %v1188 = vadd.f32 %v1047, %v1185
        %s1189 = scalar_lea.vmem %s1, 128
        %v1190 = vld [vmem:[%s1189] sm:$0xf]
        %v1191 = vld [vmem:[%s1189 + $0x4] sm:$0xf]
        %v1192 = vld [vmem:[%s1189 + $0x8] sm:$0xf]
        %v1193 = vld [vmem:[%s1189 + $0xc] sm:$0xf]
        %v1194 = vld [vmem:[%s1189 + $0x10] sm:$0xf]
        %v1195 = vld [vmem:[%s1189 + $0x14] sm:$0xf]
        %v1196 = vld [vmem:[%s1189 + $0x18] sm:$0xf]
        %v1197 = vld [vmem:[%s1189 + $0x1c] sm:$0xf]
        %s1198 = scalar_lea.vmem %s2, 4
        %v1199 = vld [vmem:[%s1198] sm:$0x1]
        %v1201 = vperm.slane %v1199, 0
        %v1211 = vunpack.c.l.b16 %v1190
        %v1212 = vunpack.c.l.b16 %v1191
        %v1213 = vunpack.c.l.b16 %v1192
        %v1214 = vunpack.c.l.b16 %v1193
        %v1215 = vunpack.c.l.b16 %v1194
        %v1216 = vunpack.c.l.b16 %v1195
        %v1217 = vunpack.c.l.b16 %v1196
        %v1218 = vunpack.c.l.b16 %v1197
        %v1219 = vpack.c.b16 %v1212, %v1211
        %v1220 = vpack.c.b16 %v1214, %v1213
        %v1221 = vpack.c.b16 %v1216, %v1215
        %v1222 = vpack.c.b16 %v1218, %v1217
        %1227 = vmatpush.bf16.msra.mxu0 0
        %1228 = vmatpush.bf16.msra.mxu0 0
        %1229 = vmatpush.bf16.msra.mxu0 0
        %1230 = vmatpush.bf16.msra.mxu0 0
        %1231 = vmatpush.bf16.msra.mxu0 %v1222
        %1232 = vmatpush.bf16.msra.mxu0 %v1221
        %1233 = vmatpush.bf16.msra.mxu0 %v1220
        %1234 = vmatpush.bf16.msra.mxu0 %v1219
        %1235 = vmatmul.bf16.gmra.mxu0 %v662
        %v1236 = vpop.f32.mrf.mxu0
        %v1237 = vadd.f32 %v1201, %v1236
        %v1238 = vpop.f32.mrf.mxu0
        %1239 = vdwg.mxu0
        %v1240 = vpack.c.bf16 %v1237, %v1237
        %v1241 = vld [vmem:[#allocation2 + $0x10] sm:$0xf]
        %v1242 = vld [vmem:[#allocation3 + $0x10] sm:$0xf]
        %v1244 = vsel %vm680, %v1240, 0
        %v1247 = vsel %vm684, %v1241, 0
        %1249 = vmatpush.bf16.msra.mxu0 0
        %1250 = vmatpush.bf16.msra.mxu0 0
        %1251 = vmatpush.bf16.msra.mxu0 0
        %1252 = vmatpush.bf16.msra.mxu0 0
        %1253 = vmatpush.bf16.msra.mxu0 0
        %1254 = vmatpush.bf16.msra.mxu0 0
        %1255 = vmatpush.bf16.msra.mxu0 0
        %1256 = vmatpush.bf16.msra.mxu0 %v1247
        %1257 = vmatmul.bf16.gmra.mxu0 %v1244
        %v1258 = vpop.f32.mrf.mxu0
        %v1259 = vadd.f32 0.0, %v1258
        %v1260 = vpop.f32.mrf.mxu0
        %1261 = vdwg.mxu0
        %v1262 = vmul.f32 %v1259, 0.35355338
        %v1263 = vsel %vm680, %v1262, -inf
        %1264 = vmax.xlane.f32.xlu0 %v1263
        %v1265 = vpop.xlane.xlu0 %1264
        %v1266 = vsub.f32 %v1262, %v1265
        %v1267 = vmul.f32 %v1266, 1.442695
        %v1268 = vpow.pop %v1267
        %v1269 = vsel %vm680, %v1268, 0.0
        %1270 = vadd.xlane.f32.xlu0 %v1269
        %v1271 = vpop.xlane.xlu0 %1270
        %v1272 = vrcp.pop %v1271
        %v1273 = vmul.f32 %v1271, %v1272
        %v1274 = vsub.f32 1.0, %v1273
        %v1275 = vmul.f32 %v1272, %v1274
        %v1276 = vadd.f32 %v1272, %v1275
        %vm1277 = vweird.f32 %v1271
        %vm1278 = vweird.f32 %v1272
        %vm1279 = vmor %vm1277, %vm1278
        %v1280 = vsel %vm1279, %v1272, %v1276
        %v1281 = vand.u32 2147483647, %v1271
        %vm1282 = vcmp.eq.f32.partialorder %v1281, 8.507059e+37
        %v1283 = vand.u32 %v1271, 2147483648
        %v1284 = vor.u32 1.1754944e-38, %v1283
        %v1285 = vsel %vm1282, %v1284, %v1280
        %v1286 = vmul.f32 %v1268, %v1285
        %v1287 = vpack.c.bf16 %v1286, %v1286
        %v1289 = vsel %vm680, %v1287, 0
        %v1292 = vsel %vm680, %v1242, 0
        %1294 = vmatpush.bf16.xpose.msra.mxu0 0
        %1295 = vmatpush.bf16.xpose.msra.mxu0 0
        %1296 = vmatpush.bf16.xpose.msra.mxu0 0
        %1297 = vmatpush.bf16.xpose.msra.mxu0 0
        %1298 = vmatpush.bf16.xpose.msra.mxu0 0
        %1299 = vmatpush.bf16.xpose.msra.mxu0 0
        %1300 = vmatpush.bf16.xpose.msra.mxu0 0
        %1301 = vmatpush.bf16.xpose.msra.mxu0 %v1292
        %1302 = vmatmul.bf16.gmra.mxu0 %v1289
        %v1303 = vpop.f32.mrf.mxu0
        %v1304 = vadd.f32 0.0, %v1303
        %v1305 = vpop.f32.mrf.mxu0
        %1306 = vdwg.mxu0
        %v1307 = vpack.c.bf16 %v1304, %v1304
        %s1308 = scalar_lea.vmem %s7, 16
        %v1309 = vld [vmem:[%s1308] sm:$0xf]
        %v1311 = vsel %vm680, %v1307, 0
        %v1314 = vsel %vm684, %v1309, 0
        %1316 = vmatpush.bf16.msra.mxu0 0
        %1317 = vmatpush.bf16.msra.mxu0 0
        %1318 = vmatpush.bf16.msra.mxu0 0
        %1319 = vmatpush.bf16.msra.mxu0 0
        %1320 = vmatpush.bf16.msra.mxu0 0
        %1321 = vmatpush.bf16.msra.mxu0 0
        %1322 = vmatpush.bf16.msra.mxu0 0
        %1323 = vmatpush.bf16.msra.mxu0 %v1314
        %1324 = vmatmul.bf16.gmra.mxu0 %v1311
        %v1325 = vpop.f32.mrf.mxu0
        %v1326 = vadd.f32 0.0, %v1325
        %v1327 = vpop.f32.mrf.mxu0
        %1328 = vdwg.mxu0
        %v1329 = vadd.f32 %v1188, %v1326
        %s1330 = scalar_lea.vmem %s1, 160
        %v1331 = vld [vmem:[%s1330] sm:$0xf]
        %v1332 = vld [vmem:[%s1330 + $0x4] sm:$0xf]
        %v1333 = vld [vmem:[%s1330 + $0x8] sm:$0xf]
        %v1334 = vld [vmem:[%s1330 + $0xc] sm:$0xf]
        %v1335 = vld [vmem:[%s1330 + $0x10] sm:$0xf]
        %v1336 = vld [vmem:[%s1330 + $0x14] sm:$0xf]
        %v1337 = vld [vmem:[%s1330 + $0x18] sm:$0xf]
        %v1338 = vld [vmem:[%s1330 + $0x1c] sm:$0xf]
        %s1339 = scalar_lea.vmem %s2, 5
        %v1340 = vld [vmem:[%s1339] sm:$0x1]
        %v1342 = vperm.slane %v1340, 0
        %v1352 = vunpack.c.l.b16 %v1331
        %v1353 = vunpack.c.l.b16 %v1332
        %v1354 = vunpack.c.l.b16 %v1333
        %v1355 = vunpack.c.l.b16 %v1334
        %v1356 = vunpack.c.l.b16 %v1335
        %v1357 = vunpack.c.l.b16 %v1336
        %v1358 = vunpack.c.l.b16 %v1337
        %v1359 = vunpack.c.l.b16 %v1338
        %v1360 = vpack.c.b16 %v1353, %v1352
        %v1361 = vpack.c.b16 %v1355, %v1354
        %v1362 = vpack.c.b16 %v1357, %v1356
        %v1363 = vpack.c.b16 %v1359, %v1358
        %1368 = vmatpush.bf16.msra.mxu0 0
        %1369 = vmatpush.bf16.msra.mxu0 0
        %1370 = vmatpush.bf16.msra.mxu0 0
        %1371 = vmatpush.bf16.msra.mxu0 0
        %1372 = vmatpush.bf16.msra.mxu0 %v1363
        %1373 = vmatpush.bf16.msra.mxu0 %v1362
        %1374 = vmatpush.bf16.msra.mxu0 %v1361
        %1375 = vmatpush.bf16.msra.mxu0 %v1360
        %1376 = vmatmul.bf16.gmra.mxu0 %v662
        %v1377 = vpop.f32.mrf.mxu0
        %v1378 = vadd.f32 %v1342, %v1377
        %v1379 = vpop.f32.mrf.mxu0
        %1380 = vdwg.mxu0
        %v1381 = vpack.c.bf16 %v1378, %v1378
        %v1382 = vld [vmem:[#allocation2 + $0x14] sm:$0xf]
        %v1383 = vld [vmem:[#allocation3 + $0x14] sm:$0xf]
        %v1385 = vsel %vm680, %v1381, 0
        %v1388 = vsel %vm684, %v1382, 0
        %1390 = vmatpush.bf16.msra.mxu0 0
        %1391 = vmatpush.bf16.msra.mxu0 0
        %1392 = vmatpush.bf16.msra.mxu0 0
        %1393 = vmatpush.bf16.msra.mxu0 0
        %1394 = vmatpush.bf16.msra.mxu0 0
        %1395 = vmatpush.bf16.msra.mxu0 0
        %1396 = vmatpush.bf16.msra.mxu0 0
        %1397 = vmatpush.bf16.msra.mxu0 %v1388
        %1398 = vmatmul.bf16.gmra.mxu0 %v1385
        %v1399 = vpop.f32.mrf.mxu0
        %v1400 = vadd.f32 0.0, %v1399
        %v1401 = vpop.f32.mrf.mxu0
        %1402 = vdwg.mxu0
        %v1403 = vmul.f32 %v1400, 0.35355338
        %v1404 = vsel %vm680, %v1403, -inf
        %1405 = vmax.xlane.f32.xlu0 %v1404
        %v1406 = vpop.xlane.xlu0 %1405
        %v1407 = vsub.f32 %v1403, %v1406
        %v1408 = vmul.f32 %v1407, 1.442695
        %v1409 = vpow.pop %v1408
        %v1410 = vsel %vm680, %v1409, 0.0
        %1411 = vadd.xlane.f32.xlu0 %v1410
        %v1412 = vpop.xlane.xlu0 %1411
        %v1413 = vrcp.pop %v1412
        %v1414 = vmul.f32 %v1412, %v1413
        %v1415 = vsub.f32 1.0, %v1414
        %v1416 = vmul.f32 %v1413, %v1415
        %v1417 = vadd.f32 %v1413, %v1416
        %vm1418 = vweird.f32 %v1412
        %vm1419 = vweird.f32 %v1413
        %vm1420 = vmor %vm1418, %vm1419
        %v1421 = vsel %vm1420, %v1413, %v1417
        %v1422 = vand.u32 2147483647, %v1412
        %vm1423 = vcmp.eq.f32.partialorder %v1422, 8.507059e+37
        %v1424 = vand.u32 %v1412, 2147483648
        %v1425 = vor.u32 1.1754944e-38, %v1424
        %v1426 = vsel %vm1423, %v1425, %v1421
        %v1427 = vmul.f32 %v1409, %v1426
        %v1428 = vpack.c.bf16 %v1427, %v1427
        %v1430 = vsel %vm680, %v1428, 0
        %v1433 = vsel %vm680, %v1383, 0
        %1435 = vmatpush.bf16.xpose.msra.mxu0 0
        %1436 = vmatpush.bf16.xpose.msra.mxu0 0
        %1437 = vmatpush.bf16.xpose.msra.mxu0 0
        %1438 = vmatpush.bf16.xpose.msra.mxu0 0
        %1439 = vmatpush.bf16.xpose.msra.mxu0 0
        %1440 = vmatpush.bf16.xpose.msra.mxu0 0
        %1441 = vmatpush.bf16.xpose.msra.mxu0 0
        %1442 = vmatpush.bf16.xpose.msra.mxu0 %v1433
        %1443 = vmatmul.bf16.gmra.mxu0 %v1430
        %v1444 = vpop.f32.mrf.mxu0
        %v1445 = vadd.f32 0.0, %v1444
        %v1446 = vpop.f32.mrf.mxu0
        %1447 = vdwg.mxu0
        %v1448 = vpack.c.bf16 %v1445, %v1445
        %s1449 = scalar_lea.vmem %s7, 20
        %v1450 = vld [vmem:[%s1449] sm:$0xf]
        %v1452 = vsel %vm680, %v1448, 0
        %v1455 = vsel %vm684, %v1450, 0
        %1457 = vmatpush.bf16.msra.mxu0 0
        %1458 = vmatpush.bf16.msra.mxu0 0
        %1459 = vmatpush.bf16.msra.mxu0 0
        %1460 = vmatpush.bf16.msra.mxu0 0
        %1461 = vmatpush.bf16.msra.mxu0 0
        %1462 = vmatpush.bf16.msra.mxu0 0
        %1463 = vmatpush.bf16.msra.mxu0 0
        %1464 = vmatpush.bf16.msra.mxu0 %v1455
        %1465 = vmatmul.bf16.gmra.mxu0 %v1452
        %v1466 = vpop.f32.mrf.mxu0
        %v1467 = vadd.f32 0.0, %v1466
        %v1468 = vpop.f32.mrf.mxu0
        %1469 = vdwg.mxu0
        %v1470 = vadd.f32 %v1329, %v1467
        %s1471 = scalar_lea.vmem %s1, 192
        %v1472 = vld [vmem:[%s1471] sm:$0xf]
        %v1473 = vld [vmem:[%s1471 + $0x4] sm:$0xf]
        %v1474 = vld [vmem:[%s1471 + $0x8] sm:$0xf]
        %v1475 = vld [vmem:[%s1471 + $0xc] sm:$0xf]
        %v1476 = vld [vmem:[%s1471 + $0x10] sm:$0xf]
        %v1477 = vld [vmem:[%s1471 + $0x14] sm:$0xf]
        %v1478 = vld [vmem:[%s1471 + $0x18] sm:$0xf]
        %v1479 = vld [vmem:[%s1471 + $0x1c] sm:$0xf]
        %s1480 = scalar_lea.vmem %s2, 6
        %v1481 = vld [vmem:[%s1480] sm:$0x1]
        %v1483 = vperm.slane %v1481, 0
        %v1493 = vunpack.c.l.b16 %v1472
        %v1494 = vunpack.c.l.b16 %v1473
        %v1495 = vunpack.c.l.b16 %v1474
        %v1496 = vunpack.c.l.b16 %v1475
        %v1497 = vunpack.c.l.b16 %v1476
        %v1498 = vunpack.c.l.b16 %v1477
        %v1499 = vunpack.c.l.b16 %v1478
        %v1500 = vunpack.c.l.b16 %v1479
        %v1501 = vpack.c.b16 %v1494, %v1493
        %v1502 = vpack.c.b16 %v1496, %v1495
        %v1503 = vpack.c.b16 %v1498, %v1497
        %v1504 = vpack.c.b16 %v1500, %v1499
        %1509 = vmatpush.bf16.msra.mxu0 0
        %1510 = vmatpush.bf16.msra.mxu0 0
        %1511 = vmatpush.bf16.msra.mxu0 0
        %1512 = vmatpush.bf16.msra.mxu0 0
        %1513 = vmatpush.bf16.msra.mxu0 %v1504
        %1514 = vmatpush.bf16.msra.mxu0 %v1503
        %1515 = vmatpush.bf16.msra.mxu0 %v1502
        %1516 = vmatpush.bf16.msra.mxu0 %v1501
        %1517 = vmatmul.bf16.gmra.mxu0 %v662
        %v1518 = vpop.f32.mrf.mxu0
        %v1519 = vadd.f32 %v1483, %v1518
        %v1520 = vpop.f32.mrf.mxu0
        %1521 = vdwg.mxu0
        %v1522 = vpack.c.bf16 %v1519, %v1519
        %v1523 = vld [vmem:[#allocation2 + $0x18] sm:$0xf]
        %v1524 = vld [vmem:[#allocation3 + $0x18] sm:$0xf]
        %v1526 = vsel %vm680, %v1522, 0
        %v1529 = vsel %vm684, %v1523, 0
        %1531 = vmatpush.bf16.msra.mxu0 0
        %1532 = vmatpush.bf16.msra.mxu0 0
        %1533 = vmatpush.bf16.msra.mxu0 0
        %1534 = vmatpush.bf16.msra.mxu0 0
        %1535 = vmatpush.bf16.msra.mxu0 0
        %1536 = vmatpush.bf16.msra.mxu0 0
        %1537 = vmatpush.bf16.msra.mxu0 0
        %1538 = vmatpush.bf16.msra.mxu0 %v1529
        %1539 = vmatmul.bf16.gmra.mxu0 %v1526
        %v1540 = vpop.f32.mrf.mxu0
        %v1541 = vadd.f32 0.0, %v1540
        %v1542 = vpop.f32.mrf.mxu0
        %1543 = vdwg.mxu0
        %v1544 = vmul.f32 %v1541, 0.35355338
        %v1545 = vsel %vm680, %v1544, -inf
        %1546 = vmax.xlane.f32.xlu0 %v1545
        %v1547 = vpop.xlane.xlu0 %1546
        %v1548 = vsub.f32 %v1544, %v1547
        %v1549 = vmul.f32 %v1548, 1.442695
        %v1550 = vpow.pop %v1549
        %v1551 = vsel %vm680, %v1550, 0.0
        %1552 = vadd.xlane.f32.xlu0 %v1551
        %v1553 = vpop.xlane.xlu0 %1552
        %v1554 = vrcp.pop %v1553
        %v1555 = vmul.f32 %v1553, %v1554
        %v1556 = vsub.f32 1.0, %v1555
        %v1557 = vmul.f32 %v1554, %v1556
        %v1558 = vadd.f32 %v1554, %v1557
        %vm1559 = vweird.f32 %v1553
        %vm1560 = vweird.f32 %v1554
        %vm1561 = vmor %vm1559, %vm1560
        %v1562 = vsel %vm1561, %v1554, %v1558
        %v1563 = vand.u32 2147483647, %v1553
        %vm1564 = vcmp.eq.f32.partialorder %v1563, 8.507059e+37
        %v1565 = vand.u32 %v1553, 2147483648
        %v1566 = vor.u32 1.1754944e-38, %v1565
        %v1567 = vsel %vm1564, %v1566, %v1562
        %v1568 = vmul.f32 %v1550, %v1567
        %v1569 = vpack.c.bf16 %v1568, %v1568
        %v1571 = vsel %vm680, %v1569, 0
        %v1574 = vsel %vm680, %v1524, 0
        %1576 = vmatpush.bf16.xpose.msra.mxu0 0
        %1577 = vmatpush.bf16.xpose.msra.mxu0 0
        %1578 = vmatpush.bf16.xpose.msra.mxu0 0
        %1579 = vmatpush.bf16.xpose.msra.mxu0 0
        %1580 = vmatpush.bf16.xpose.msra.mxu0 0
        %1581 = vmatpush.bf16.xpose.msra.mxu0 0
        %1582 = vmatpush.bf16.xpose.msra.mxu0 0
        %1583 = vmatpush.bf16.xpose.msra.mxu0 %v1574
        %1584 = vmatmul.bf16.gmra.mxu0 %v1571
        %v1585 = vpop.f32.mrf.mxu0
        %v1586 = vadd.f32 0.0, %v1585
        %v1587 = vpop.f32.mrf.mxu0
        %1588 = vdwg.mxu0
        %v1589 = vpack.c.bf16 %v1586, %v1586
        %s1590 = scalar_lea.vmem %s7, 24
        %v1591 = vld [vmem:[%s1590] sm:$0xf]
        %v1593 = vsel %vm680, %v1589, 0
        %v1596 = vsel %vm684, %v1591, 0
        %1598 = vmatpush.bf16.msra.mxu0 0
        %1599 = vmatpush.bf16.msra.mxu0 0
        %1600 = vmatpush.bf16.msra.mxu0 0
        %1601 = vmatpush.bf16.msra.mxu0 0
        %1602 = vmatpush.bf16.msra.mxu0 0
        %1603 = vmatpush.bf16.msra.mxu0 0
        %1604 = vmatpush.bf16.msra.mxu0 0
        %1605 = vmatpush.bf16.msra.mxu0 %v1596
        %1606 = vmatmul.bf16.gmra.mxu0 %v1593
        %v1607 = vpop.f32.mrf.mxu0
        %v1608 = vadd.f32 0.0, %v1607
        %v1609 = vpop.f32.mrf.mxu0
        %1610 = vdwg.mxu0
        %v1611 = vadd.f32 %v1470, %v1608
        %s1612 = scalar_lea.vmem %s1, 224
        %v1613 = vld [vmem:[%s1612] sm:$0xf]
        %v1614 = vld [vmem:[%s1612 + $0x4] sm:$0xf]
        %v1615 = vld [vmem:[%s1612 + $0x8] sm:$0xf]
        %v1616 = vld [vmem:[%s1612 + $0xc] sm:$0xf]
        %v1617 = vld [vmem:[%s1612 + $0x10] sm:$0xf]
        %v1618 = vld [vmem:[%s1612 + $0x14] sm:$0xf]
        %v1619 = vld [vmem:[%s1612 + $0x18] sm:$0xf]
        %v1620 = vld [vmem:[%s1612 + $0x1c] sm:$0xf]
        %s1621 = scalar_lea.vmem %s2, 7
        %v1622 = vld [vmem:[%s1621] sm:$0x1]
        %v1624 = vperm.slane %v1622, 0
        %v1634 = vunpack.c.l.b16 %v1613
        %v1635 = vunpack.c.l.b16 %v1614
        %v1636 = vunpack.c.l.b16 %v1615
        %v1637 = vunpack.c.l.b16 %v1616
        %v1638 = vunpack.c.l.b16 %v1617
        %v1639 = vunpack.c.l.b16 %v1618
        %v1640 = vunpack.c.l.b16 %v1619
        %v1641 = vunpack.c.l.b16 %v1620
        %v1642 = vpack.c.b16 %v1635, %v1634
        %v1643 = vpack.c.b16 %v1637, %v1636
        %v1644 = vpack.c.b16 %v1639, %v1638
        %v1645 = vpack.c.b16 %v1641, %v1640
        %1650 = vmatpush.bf16.msra.mxu0 0
        %1651 = vmatpush.bf16.msra.mxu0 0
        %1652 = vmatpush.bf16.msra.mxu0 0
        %1653 = vmatpush.bf16.msra.mxu0 0
        %1654 = vmatpush.bf16.msra.mxu0 %v1645
        %1655 = vmatpush.bf16.msra.mxu0 %v1644
        %1656 = vmatpush.bf16.msra.mxu0 %v1643
        %1657 = vmatpush.bf16.msra.mxu0 %v1642
        %1658 = vmatmul.bf16.gmra.mxu0 %v662
        %v1659 = vpop.f32.mrf.mxu0
        %v1660 = vadd.f32 %v1624, %v1659
        %v1661 = vpop.f32.mrf.mxu0
        %1662 = vdwg.mxu0
        %v1663 = vpack.c.bf16 %v1660, %v1660
        %v1664 = vld [vmem:[#allocation2 + $0x1c] sm:$0xf]
        %v1665 = vld [vmem:[#allocation3 + $0x1c] sm:$0xf]
        %v1667 = vsel %vm680, %v1663, 0
        %v1670 = vsel %vm684, %v1664, 0
        %1672 = vmatpush.bf16.msra.mxu0 0
        %1673 = vmatpush.bf16.msra.mxu0 0
        %1674 = vmatpush.bf16.msra.mxu0 0
        %1675 = vmatpush.bf16.msra.mxu0 0
        %1676 = vmatpush.bf16.msra.mxu0 0
        %1677 = vmatpush.bf16.msra.mxu0 0
        %1678 = vmatpush.bf16.msra.mxu0 0
        %1679 = vmatpush.bf16.msra.mxu0 %v1670
        %1680 = vmatmul.bf16.gmra.mxu0 %v1667
        %v1681 = vpop.f32.mrf.mxu0
        %v1682 = vadd.f32 0.0, %v1681
        %v1683 = vpop.f32.mrf.mxu0
        %1684 = vdwg.mxu0
        %v1685 = vmul.f32 %v1682, 0.35355338
        %v1686 = vsel %vm680, %v1685, -inf
        %1687 = vmax.xlane.f32.xlu0 %v1686
        %v1688 = vpop.xlane.xlu0 %1687
        %v1689 = vsub.f32 %v1685, %v1688
        %v1690 = vmul.f32 %v1689, 1.442695
        %v1691 = vpow.pop %v1690
        %v1692 = vsel %vm680, %v1691, 0.0
        %1693 = vadd.xlane.f32.xlu0 %v1692
        %v1694 = vpop.xlane.xlu0 %1693
        %v1695 = vrcp.pop %v1694
        %v1696 = vmul.f32 %v1694, %v1695
        %v1697 = vsub.f32 1.0, %v1696
        %v1698 = vmul.f32 %v1695, %v1697
        %v1699 = vadd.f32 %v1695, %v1698
        %vm1700 = vweird.f32 %v1694
        %vm1701 = vweird.f32 %v1695
        %vm1702 = vmor %vm1700, %vm1701
        %v1703 = vsel %vm1702, %v1695, %v1699
        %v1704 = vand.u32 2147483647, %v1694
        %vm1705 = vcmp.eq.f32.partialorder %v1704, 8.507059e+37
        %v1706 = vand.u32 %v1694, 2147483648
        %v1707 = vor.u32 1.1754944e-38, %v1706
        %v1708 = vsel %vm1705, %v1707, %v1703
        %v1709 = vmul.f32 %v1691, %v1708
        %v1710 = vpack.c.bf16 %v1709, %v1709
        %v1712 = vsel %vm680, %v1710, 0
        %v1715 = vsel %vm680, %v1665, 0
        %1717 = vmatpush.bf16.xpose.msra.mxu0 0
        %1718 = vmatpush.bf16.xpose.msra.mxu0 0
        %1719 = vmatpush.bf16.xpose.msra.mxu0 0
        %1720 = vmatpush.bf16.xpose.msra.mxu0 0
        %1721 = vmatpush.bf16.xpose.msra.mxu0 0
        %1722 = vmatpush.bf16.xpose.msra.mxu0 0
        %1723 = vmatpush.bf16.xpose.msra.mxu0 0
        %1724 = vmatpush.bf16.xpose.msra.mxu0 %v1715
        %1725 = vmatmul.bf16.gmra.mxu0 %v1712
        %v1726 = vpop.f32.mrf.mxu0
        %v1727 = vadd.f32 0.0, %v1726
        %v1728 = vpop.f32.mrf.mxu0
        %1729 = vdwg.mxu0
        %v1730 = vpack.c.bf16 %v1727, %v1727
        %s1731 = scalar_lea.vmem %s7, 28
        %v1732 = vld [vmem:[%s1731] sm:$0xf]
        %v1734 = vsel %vm680, %v1730, 0
        %v1737 = vsel %vm684, %v1732, 0
        %1739 = vmatpush.bf16.msra.mxu0 0
        %1740 = vmatpush.bf16.msra.mxu0 0
        %1741 = vmatpush.bf16.msra.mxu0 0
        %1742 = vmatpush.bf16.msra.mxu0 0
        %1743 = vmatpush.bf16.msra.mxu0 0
        %1744 = vmatpush.bf16.msra.mxu0 0
        %1745 = vmatpush.bf16.msra.mxu0 0
        %1746 = vmatpush.bf16.msra.mxu0 %v1737
        %1747 = vmatmul.bf16.gmra.mxu0 %v1734
        %v1748 = vpop.f32.mrf.mxu0
        %v1749 = vadd.f32 0.0, %v1748
        %v1750 = vpop.f32.mrf.mxu0
        %1751 = vdwg.mxu0
        %v1752 = vadd.f32 %v1611, %v1749
        %v1753 = vld [vmem:[%s8] sm:$0x1]
        %v1755 = vperm.slane %v1753, 0
        %v1757 = vadd.f32 %v1752, %v1755
        %1758 = vst.msk [vmem:[%s337] sm:$0xff] %vm660, %v1757
        %s1759 = sand.u32 %s239, 1
        %s1760 = scalar_lea.sflag [#allocation5], %s1759
        %s1761 = sand.u32 %s239, 1
        %s1762 = smul.addr %s1761, 8
        %s1763 = scalar_lea.vmem [#allocation4], %s1762
        // Predicated region
        $region61: #{linear_attention_forward.1} parent=55 // pred_check
          %p1764 = pneg %p249
        $region62: #{linear_attention_forward.1} parent=55 // pred_check_branch
          %1766 = sbr.rel (%p1764) target = $region64
        $region63: #{linear_attention_forward.1} parent=55 // pred_region
          %1768 = vsyncadd %s1760, 0
          %s1769 = sadd.s32 %s28, %s27
          %s1770 = smul.addr %s1769, 8
          %s1771 = scalar_lea.hbm %s9, %s1770
          %s1773 = sshll.u32 %s1763, 4
          %s1774 = int_to_ptr.vmem [resolvable:$true] %s1773
          %s1775 = sshll.u32 %s1771, 4
          %s1776 = int_to_ptr.hbm [resolvable:$true] %s1775
          %1778 = dma.vmem_to_hbm [thread:$0]  %s1774, 128, %s1776, %s1760
        $region64: #{linear_attention_forward.1} parent=55 // pred_fallthru
          _
      $region56: #{linear_attention_forward.1} parent=5 // pred_fallthru
        _
      %p1779 = scmp.le.s32.totalorder 2, %s18
      // Predicated region
      $region65: #{linear_attention_forward.1} parent=5 // pred_check
        %p1780 = pneg %p1779
      $region66: #{linear_attention_forward.1} parent=5 // pred_check_branch
        %1782 = sbr.rel (%p1780) target = $region68
      $region67: #{linear_attention_forward.1} parent=5 // pred_region
        %s1783 = ssub.s32 %s18, 2
        // Predicated region
        $region69: #{linear_attention_forward.1} parent=67 // pred_check
          %p1784 = pneg %p255
        $region70: #{linear_attention_forward.1} parent=67 // pred_check_branch
          %1786 = sbr.rel (%p1784) target = $region72
        $region71: #{linear_attention_forward.1} parent=67 // pred_region
          %s1787 = sand.u32 %s240, 1
          %s1788 = scalar_lea.sflag [#allocation5], %s1787
          %s1789 = sand.u32 %s240, 1
          %s1790 = smul.addr %s1789, 8
          %s1791 = scalar_lea.vmem [#allocation4], %s1790
          %1793 = dma.done %s1788, 128
        $region72: #{linear_attention_forward.1} parent=67 // pred_fallthru
          _
      $region68: #{linear_attention_forward.1} parent=5 // pred_fallthru
        _
    $region6: #{linear_attention_forward.1} parent=1 // loop_footer
      %s22 = sadd.s32 1, %s18
    $region7: #{linear_attention_forward.1} parent=1 // loop_footer_branch
      %17 = sbr.rel target = $region3
    $region8: #{linear_attention_forward.1} parent=1 // loop_exit
      _
    %1794 = vsyncpa [#allocation5], 1
    %s1795 = scalar_lea.sflag [#allocation5], 1
    %1796 = vsyncpa %s1795, 1

</llo_original>
